<compile_context>
chip_gen: v6e
topology: v6e:2x2x1
jax: 0.10.0
libtpu: 0.0.40
codegen_flags: <defaults>
</compile_context>

<pallas_src>
import jax
import jax.numpy as jnp
from jax.experimental import pallas as pl
from jax.experimental.pallas import tpu as pltpu


# -----------------------------------------------------------------------------
# Fused kernel: bi-LSTM recurrence + linear head + softmax
# -----------------------------------------------------------------------------
def _bilstm_head_kernel(x_ref, wxf_ref, wxb_ref, whh_ref, bias_ref,
                        wlog_ref, blog_ref,
                        probs_ref, hcat_ref,
                        gxf_scr, gxb_scr):
    B, T, D = x_ref.shape
    H2, G = whh_ref.shape          # H2 = 2*H (fwd|bwd state), G = 8*H (4 gates x 2 dir)
    H = H2 // 2

    # ---- hoisted input projections for both directions (one MXU push each) ----
    x2d = x_ref[...].reshape(B * T, D)                       # row b*T + t == x[b, t]
    gxf = jnp.dot(x2d, wxf_ref[...],
                  preferred_element_type=jnp.float32) + bias_ref[...]
    gxb = jnp.dot(x2d, wxb_ref[...], preferred_element_type=jnp.float32)
    gxf_scr[...] = gxf.reshape(B, T, G)
    gxb_scr[...] = gxb.reshape(B, T, G)

    whh = whh_ref[...]                                        # (2H, 8H) block-diagonal
    h = jnp.zeros((B, H2), jnp.float32)                       # [h_fwd | h_bwd]
    c = jnp.zeros((B, H2), jnp.float32)                       # [c_fwd | c_bwd]
    hb_first = jnp.zeros((B, H), jnp.float32)

    # Fully-unrolled recurrence. Step s: fwd consumes x[:, s], bwd consumes
    # x[:, T-1-s]; one fused (B,2H)x(2H,8H) matmul carries both directions.
    for s in range(T):
        gates = (gxf_scr[:, s, :] + gxb_scr[:, T - 1 - s, :]
                 + jnp.dot(h, whh, preferred_element_type=jnp.float32))   # (B, 8H)
        sg = jax.nn.sigmoid(gates)          # full-width EUP passes, then 2H-wide slices
        tg = jnp.tanh(gates)
        i_g = sg[:, 0 * H2:1 * H2]
        f_g = sg[:, 1 * H2:2 * H2]
        g_g = tg[:, 2 * H2:3 * H2]
        o_g = sg[:, 3 * H2:4 * H2]
        c = f_g * c + i_g * g_g
        h = o_g * jnp.tanh(c)
        if s == 0:
            # bwd hidden after its first step (input x[:, T-1]) == out[:, -1, H:]
            hb_first = h[:, H:]

    h_cat = jnp.concatenate([h[:, :H], hb_first], axis=1)     # (B, 2H) == out[:, -1, :]
    hcat_ref[...] = h_cat

    # ---- linear head + softmax (fused; no separate kernel launch) ----
    logits = jnp.dot(h_cat, wlog_ref[...],
                     preferred_element_type=jnp.float32) + blog_ref[...]
    m = jnp.max(logits, axis=1, keepdims=True)
    e = jnp.exp(logits - m)
    probs_ref[...] = e / jnp.sum(e, axis=1, keepdims=True)


def _fused_forward_call(x, p):
    B, T, D = x.shape
    H2, G = p["whh"].shape
    C = p["w_log_t"].shape[1]
    vmem = pl.BlockSpec(memory_space=pltpu.MemorySpace.VMEM)
    return pl.pallas_call(
        _bilstm_head_kernel,
        out_shape=(jax.ShapeDtypeStruct((B, C), jnp.float32),    # softmax probs
                   jax.ShapeDtypeStruct((B, H2), jnp.float32)),  # latent h
        in_specs=[vmem] * 7,
        out_specs=(vmem, vmem),
        scratch_shapes=[pltpu.VMEM((B, T, G), jnp.float32),      # hoisted fwd x-proj
                        pltpu.VMEM((B, T, G), jnp.float32)],     # hoisted bwd x-proj
    )(x, p["wx_f"], p["wx_b"], p["whh"], p["bias"], p["w_log_t"], p["b_log"])


@jax.jit
def lstm_model_forward(x, params):
    probs, h_cat = _fused_forward_call(x, params)
    # TODO(synk): meglass mean/std concat path not implemented (use_meglass=False
    # for which_feature='openface_8').
    return probs[:, -1], h_cat


# -----------------------------------------------------------------------------
# PyTorch-layout parameter init + packing into the fused block-diagonal layout
# -----------------------------------------------------------------------------
def init_raw_params(key, input_size, hidden_size, num_classes=2):
    """PyTorch default init: LSTM ~ U(-1/sqrt(H), 1/sqrt(H)), Linear ~ U(-1/sqrt(fan_in))."""
    H, D = hidden_size, input_size
    lim = 1.0 / (H ** 0.5)
    keys = jax.random.split(key, 10)

    def u(kk, shape, l):
        return jax.random.uniform(kk, shape, jnp.float32, minval=-l, maxval=l)

    raw = {
        "wih_f": u(keys[0], (4 * H, D), lim), "whh_f": u(keys[1], (4 * H, H), lim),
        "bih_f": u(keys[2], (4 * H,), lim),   "bhh_f": u(keys[3], (4 * H,), lim),
        "wih_b": u(keys[4], (4 * H, D), lim), "whh_b": u(keys[5], (4 * H, H), lim),
        "bih_b": u(keys[6], (4 * H,), lim),   "bhh_b": u(keys[7], (4 * H,), lim),
    }
    lim_l = 1.0 / ((2 * H) ** 0.5)
    raw["w_log"] = u(keys[8], (num_classes, 2 * H), lim_l)
    raw["b_log"] = u(keys[9], (num_classes,), lim_l)
    return raw


def pack_params(raw):
    """Pack PyTorch-layout weights into the fused layout.

    Gate columns: [i | f | g | o], each 2H wide (first H = forward direction,
    last H = backward direction), aligned with the packed [fwd|bwd] h/c state.
    """
    H = raw["whh_f"].shape[1]
    D = raw["wih_f"].shape[1]
    C = raw["w_log"].shape[0]
    G = 8 * H

    wih_f_t, wih_b_t = raw["wih_f"].T, raw["wih_b"].T      # (D, 4H)
    whh_f_t, whh_b_t = raw["whh_f"].T, raw["whh_b"].T      # (H, 4H)
    b_f = raw["bih_f"] + raw["bhh_f"]
    b_b = raw["bih_b"] + raw["bhh_b"]

    wx_f = jnp.zeros((D, G), jnp.float32)
    wx_b = jnp.zeros((D, G), jnp.float32)
    whh = jnp.zeros((2 * H, G), jnp.float32)
    bias = jnp.zeros((1, G), jnp.float32)
    for k in range(4):                                      # PyTorch gate order i, f, g, o
        src = slice(k * H, (k + 1) * H)
        col_f = slice(2 * k * H, 2 * k * H + H)
        col_b = slice(2 * k * H + H, 2 * (k + 1) * H)
        wx_f = wx_f.at[:, col_f].set(wih_f_t[:, src])
        wx_b = wx_b.at[:, col_b].set(wih_b_t[:, src])
        whh = whh.at[0:H, col_f].set(whh_f_t[:, src])
        whh = whh.at[H:2 * H, col_b].set(whh_b_t[:, src])
        bias = bias.at[0, col_f].set(b_f[src])
        bias = bias.at[0, col_b].set(b_b[src])

    return {
        "wx_f": wx_f, "wx_b": wx_b, "whh": whh, "bias": bias,
        "w_log_t": raw["w_log"].T,                # (2H, C)
        "b_log": raw["b_log"].reshape(1, C),
    }


# -----------------------------------------------------------------------------
# Pure-JAX transliteration of the PyTorch forward (correctness reference)
# -----------------------------------------------------------------------------
def _ref_lstm_cell(x_t, h, c, w_ih, w_hh, b_ih, b_hh, H):
    hp = jax.lax.Precision.HIGHEST
    gates = (jnp.dot(x_t, w_ih.T, precision=hp)
             + jnp.dot(h, w_hh.T, precision=hp) + b_ih + b_hh)
    i = jax.nn.sigmoid(gates[:, 0 * H:1 * H])
    f = jax.nn.sigmoid(gates[:, 1 * H:2 * H])
    g = jnp.tanh(gates[:, 2 * H:3 * H])
    o = jax.nn.sigmoid(gates[:, 3 * H:4 * H])
    c = f * c + i * g
    h = o * jnp.tanh(c)
    return h, c


def reference_forward(x, raw):
    B, T, D = x.shape
    H = raw["whh_f"].shape[1]
    h = jnp.zeros((B, H), jnp.float32)
    c = jnp.zeros((B, H), jnp.float32)
    for t in range(T):                                       # forward direction
        h, c = _ref_lstm_cell(x[:, t], h, c, raw["wih_f"], raw["whh_f"],
                              raw["bih_f"], raw["bhh_f"], H)
    h_fwd_last = h
    hb = jnp.zeros((B, H), jnp.float32)                      # backward direction
    cb = jnp.zeros((B, H), jnp.float32)
    out_b = [None] * T
    for t in range(T - 1, -1, -1):
        hb, cb = _ref_lstm_cell(x[:, t], hb, cb, raw["wih_b"], raw["whh_b"],
                                raw["bih_b"], raw["bhh_b"], H)
        out_b[t] = hb
    h_cat = jnp.concatenate([h_fwd_last, out_b[T - 1]], axis=1)
    logits = jnp.dot(h_cat, raw["w_log"].T,
                     precision=jax.lax.Precision.HIGHEST) + raw["b_log"]
    p = jax.nn.softmax(logits, axis=1)
    return p[:, -1], h_cat


if __name__ == "__main__":
    B, T, D, H = 2, 8, 8, 32     # batch=2, seq=8, openface_8 features, h_size=32

    key = jax.random.PRNGKey(0)
    k_x, k_p = jax.random.split(key)
    x = jax.random.normal(k_x, (B, T, D), dtype=jnp.float32)

    raw = init_raw_params(k_p, input_size=D, hidden_size=H)
    params = pack_params(raw)

    p_last, h_cat = lstm_model_forward(x, params)
    jax.block_until_ready((p_last, h_cat))

    assert p_last.shape == (B,)
    assert h_cat.shape == (B, 2 * H)

    # numerical check against the pure-JAX transliteration of the PyTorch forward
    p_ref, h_ref = reference_forward(x, raw)
    assert jnp.allclose(p_last, p_ref, atol=2e-3, rtol=2e-3)
    assert jnp.allclose(h_cat, h_ref, atol=2e-3, rtol=2e-3)

    print("KERNEL_OK")
</pallas_src>

<mosaic_0001>
module attributes {stable_mosaic.version = 11 : i64} {
  func.func @_bilstm_head_kernel(%arg0: memref<2x8x8xf32, #tpu.memory_space<vmem>>, %arg1: memref<8x256xf32, #tpu.memory_space<vmem>>, %arg2: memref<8x256xf32, #tpu.memory_space<vmem>>, %arg3: memref<64x256xf32, #tpu.memory_space<vmem>>, %arg4: memref<1x256xf32, #tpu.memory_space<vmem>>, %arg5: memref<64x2xf32, #tpu.memory_space<vmem>>, %arg6: memref<1x2xf32, #tpu.memory_space<vmem>>, %arg7: memref<2x2xf32, #tpu.memory_space<vmem>>, %arg8: memref<2x64xf32, #tpu.memory_space<vmem>>, %arg9: memref<2x8x256xf32, #tpu.memory_space<vmem>>, %arg10: memref<2x8x256xf32, #tpu.memory_space<vmem>>) attributes {dimension_semantics = [], scalar_prefetch = 0 : i64, scratch_operands = 2 : i64, tpu.core_type = #tpu.core_type<tc>} {
    %c0 = arith.constant 0 : index
    %c0_0 = arith.constant 0 : index
    %c0_1 = arith.constant 0 : index
    %0 = vector.load %arg0[%c0, %c0_0, %c0_1] : memref<2x8x8xf32, #tpu.memory_space<vmem>>, vector<2x8x8xf32>
    %1 = vector.shape_cast %0 : vector<2x8x8xf32> to vector<16x8xf32>
    %c0_2 = arith.constant 0 : index
    %c0_3 = arith.constant 0 : index
    %2 = vector.load %arg1[%c0_2, %c0_3] : memref<8x256xf32, #tpu.memory_space<vmem>>, vector<8x256xf32>
    %cst = arith.constant dense<0.000000e+00> : vector<16x256xf32>
    %3 = tpu.matmul %1, %2, %cst {dimension_numbers = #tpu.dot_dimension_numbers<[1], [0], [0], [1], [0, 0, 1, 1], [], []>} : vector<16x8xf32>, vector<8x256xf32>, vector<16x256xf32> -> vector<16x256xf32>
    %c0_4 = arith.constant 0 : index
    %c0_5 = arith.constant 0 : index
    %4 = vector.load %arg4[%c0_4, %c0_5] : memref<1x256xf32, #tpu.memory_space<vmem>>, vector<1x256xf32>
    %5 = vector.broadcast %4 : vector<1x256xf32> to vector<16x256xf32>
    %6 = arith.addf %3, %5 : vector<16x256xf32>
    %c0_6 = arith.constant 0 : index
    %c0_7 = arith.constant 0 : index
    %7 = vector.load %arg2[%c0_6, %c0_7] : memref<8x256xf32, #tpu.memory_space<vmem>>, vector<8x256xf32>
    %cst_8 = arith.constant dense<0.000000e+00> : vector<16x256xf32>
    %8 = tpu.matmul %1, %7, %cst_8 {dimension_numbers = #tpu.dot_dimension_numbers<[1], [0], [0], [1], [0, 0, 1, 1], [], []>} : vector<16x8xf32>, vector<8x256xf32>, vector<16x256xf32> -> vector<16x256xf32>
    %9 = vector.shape_cast %6 : vector<16x256xf32> to vector<2x8x256xf32>
    %c0_9 = arith.constant 0 : index
    %c0_10 = arith.constant 0 : index
    %c0_11 = arith.constant 0 : index
    %10 = vector.load %arg9[%c0_9, %c0_10, %c0_11] : memref<2x8x256xf32, #tpu.memory_space<vmem>>, vector<2x8x256xf32>
    tpu.vector_store %arg9[%c0_9, %c0_10, %c0_11], %9 {strides = array<i32>} : memref<2x8x256xf32, #tpu.memory_space<vmem>>, vector<2x8x256xf32>,
    %11 = vector.shape_cast %8 : vector<16x256xf32> to vector<2x8x256xf32>
    %c0_12 = arith.constant 0 : index
    %c0_13 = arith.constant 0 : index
    %c0_14 = arith.constant 0 : index
    %12 = vector.load %arg10[%c0_12, %c0_13, %c0_14] : memref<2x8x256xf32, #tpu.memory_space<vmem>>, vector<2x8x256xf32>
    tpu.vector_store %arg10[%c0_12, %c0_13, %c0_14], %11 {strides = array<i32>} : memref<2x8x256xf32, #tpu.memory_space<vmem>>, vector<2x8x256xf32>,
    %c0_15 = arith.constant 0 : index
    %c0_16 = arith.constant 0 : index
    %13 = vector.load %arg3[%c0_15, %c0_16] : memref<64x256xf32, #tpu.memory_space<vmem>>, vector<64x256xf32>
    %cst_17 = arith.constant 0.000000e+00 : f32
    %14 = vector.broadcast %cst_17 : f32 to vector<2x64xf32>
    %cst_18 = arith.constant 0.000000e+00 : f32
    %15 = vector.broadcast %cst_18 : f32 to vector<2x64xf32>
    %c0_19 = arith.constant 0 : index
    %c0_20 = arith.constant 0 : index
    %c0_21 = arith.constant 0 : index
    %16 = vector.load %arg9[%c0_19, %c0_20, %c0_21] : memref<2x8x256xf32, #tpu.memory_space<vmem>>, vector<2x1x256xf32>
    %17 = vector.shape_cast %16 : vector<2x1x256xf32> to vector<2x256xf32>
    %c0_22 = arith.constant 0 : index
    %c7 = arith.constant 7 : index
    %c0_23 = arith.constant 0 : index
    %18 = vector.load %arg10[%c0_22, %c7, %c0_23] : memref<2x8x256xf32, #tpu.memory_space<vmem>>, vector<2x1x256xf32>
    %19 = vector.shape_cast %18 : vector<2x1x256xf32> to vector<2x256xf32>
    %20 = arith.addf %17, %19 : vector<2x256xf32>
    %cst_24 = arith.constant dense<0.000000e+00> : vector<2x256xf32>
    %21 = tpu.matmul %14, %13, %cst_24 {dimension_numbers = #tpu.dot_dimension_numbers<[1], [0], [0], [1], [0, 0, 1, 1], [], []>} : vector<2x64xf32>, vector<64x256xf32>, vector<2x256xf32> -> vector<2x256xf32>
    %22 = arith.addf %20, %21 : vector<2x256xf32>
    %23 = arith.negf %22 : vector<2x256xf32>
    %24 = math.exp %23 : vector<2x256xf32>
    %cst_25 = arith.constant 1.000000e+00 : f32
    %25 = vector.broadcast %cst_25 : f32 to vector<2x256xf32>
    %26 = arith.addf %25, %24 : vector<2x256xf32>
    %27 = arith.divf %25, %26 : vector<2x256xf32>
    %28 = math.tanh %22 : vector<2x256xf32>
    %29 = vector.extract_strided_slice %27 {offsets = [0, 0], sizes = [2, 64], strides = [1, 1]} : vector<2x256xf32> to vector<2x64xf32>
    %30 = vector.extract_strided_slice %27 {offsets = [0, 64], sizes = [2, 64], strides = [1, 1]} : vector<2x256xf32> to vector<2x64xf32>
    %31 = vector.extract_strided_slice %28 {offsets = [0, 128], sizes = [2, 64], strides = [1, 1]} : vector<2x256xf32> to vector<2x64xf32>
    %32 = vector.extract_strided_slice %27 {offsets = [0, 192], sizes = [2, 64], strides = [1, 1]} : vector<2x256xf32> to vector<2x64xf32>
    %33 = arith.mulf %30, %15 : vector<2x64xf32>
    %34 = arith.mulf %29, %31 : vector<2x64xf32>
    %35 = arith.addf %33, %34 : vector<2x64xf32>
    %36 = math.tanh %35 : vector<2x64xf32>
    %37 = arith.mulf %32, %36 : vector<2x64xf32>
    %38 = vector.extract_strided_slice %37 {offsets = [0, 32], sizes = [2, 32], strides = [1, 1]} : vector<2x64xf32> to vector<2x32xf32>
    %c0_26 = arith.constant 0 : index
    %c1 = arith.constant 1 : index
    %c0_27 = arith.constant 0 : index
    %39 = vector.load %arg9[%c0_26, %c1, %c0_27] : memref<2x8x256xf32, #tpu.memory_space<vmem>>, vector<2x1x256xf32>
    %40 = vector.shape_cast %39 : vector<2x1x256xf32> to vector<2x256xf32>
    %c0_28 = arith.constant 0 : index
    %c6 = arith.constant 6 : index
    %c0_29 = arith.constant 0 : index
    %41 = vector.load %arg10[%c0_28, %c6, %c0_29] : memref<2x8x256xf32, #tpu.memory_space<vmem>>, vector<2x1x256xf32>
    %42 = vector.shape_cast %41 : vector<2x1x256xf32> to vector<2x256xf32>
    %43 = arith.addf %40, %42 : vector<2x256xf32>
    %cst_30 = arith.constant dense<0.000000e+00> : vector<2x256xf32>
    %44 = tpu.matmul %37, %13, %cst_30 {dimension_numbers = #tpu.dot_dimension_numbers<[1], [0], [0], [1], [0, 0, 1, 1], [], []>} : vector<2x64xf32>, vector<64x256xf32>, vector<2x256xf32> -> vector<2x256xf32>
    %45 = arith.addf %43, %44 : vector<2x256xf32>
    %46 = arith.negf %45 : vector<2x256xf32>
    %47 = math.exp %46 : vector<2x256xf32>
    %cst_31 = arith.constant 1.000000e+00 : f32
    %48 = vector.broadcast %cst_31 : f32 to vector<2x256xf32>
    %49 = arith.addf %48, %47 : vector<2x256xf32>
    %50 = arith.divf %48, %49 : vector<2x256xf32>
    %51 = math.tanh %45 : vector<2x256xf32>
    %52 = vector.extract_strided_slice %50 {offsets = [0, 0], sizes = [2, 64], strides = [1, 1]} : vector<2x256xf32> to vector<2x64xf32>
    %53 = vector.extract_strided_slice %50 {offsets = [0, 64], sizes = [2, 64], strides = [1, 1]} : vector<2x256xf32> to vector<2x64xf32>
    %54 = vector.extract_strided_slice %51 {offsets = [0, 128], sizes = [2, 64], strides = [1, 1]} : vector<2x256xf32> to vector<2x64xf32>
    %55 = vector.extract_strided_slice %50 {offsets = [0, 192], sizes = [2, 64], strides = [1, 1]} : vector<2x256xf32> to vector<2x64xf32>
    %56 = arith.mulf %53, %35 : vector<2x64xf32>
    %57 = arith.mulf %52, %54 : vector<2x64xf32>
    %58 = arith.addf %56, %57 : vector<2x64xf32>
    %59 = math.tanh %58 : vector<2x64xf32>
    %60 = arith.mulf %55, %59 : vector<2x64xf32>
    %c0_32 = arith.constant 0 : index
    %c2 = arith.constant 2 : index
    %c0_33 = arith.constant 0 : index
    %61 = vector.load %arg9[%c0_32, %c2, %c0_33] : memref<2x8x256xf32, #tpu.memory_space<vmem>>, vector<2x1x256xf32>
    %62 = vector.shape_cast %61 : vector<2x1x256xf32> to vector<2x256xf32>
    %c0_34 = arith.constant 0 : index
    %c5 = arith.constant 5 : index
    %c0_35 = arith.constant 0 : index
    %63 = vector.load %arg10[%c0_34, %c5, %c0_35] : memref<2x8x256xf32, #tpu.memory_space<vmem>>, vector<2x1x256xf32>
    %64 = vector.shape_cast %63 : vector<2x1x256xf32> to vector<2x256xf32>
    %65 = arith.addf %62, %64 : vector<2x256xf32>
    %cst_36 = arith.constant dense<0.000000e+00> : vector<2x256xf32>
    %66 = tpu.matmul %60, %13, %cst_36 {dimension_numbers = #tpu.dot_dimension_numbers<[1], [0], [0], [1], [0, 0, 1, 1], [], []>} : vector<2x64xf32>, vector<64x256xf32>, vector<2x256xf32> -> vector<2x256xf32>
    %67 = arith.addf %65, %66 : vector<2x256xf32>
    %68 = arith.negf %67 : vector<2x256xf32>
    %69 = math.exp %68 : vector<2x256xf32>
    %cst_37 = arith.constant 1.000000e+00 : f32
    %70 = vector.broadcast %cst_37 : f32 to vector<2x256xf32>
    %71 = arith.addf %70, %69 : vector<2x256xf32>
    %72 = arith.divf %70, %71 : vector<2x256xf32>
    %73 = math.tanh %67 : vector<2x256xf32>
    %74 = vector.extract_strided_slice %72 {offsets = [0, 0], sizes = [2, 64], strides = [1, 1]} : vector<2x256xf32> to vector<2x64xf32>
    %75 = vector.extract_strided_slice %72 {offsets = [0, 64], sizes = [2, 64], strides = [1, 1]} : vector<2x256xf32> to vector<2x64xf32>
    %76 = vector.extract_strided_slice %73 {offsets = [0, 128], sizes = [2, 64], strides = [1, 1]} : vector<2x256xf32> to vector<2x64xf32>
    %77 = vector.extract_strided_slice %72 {offsets = [0, 192], sizes = [2, 64], strides = [1, 1]} : vector<2x256xf32> to vector<2x64xf32>
    %78 = arith.mulf %75, %58 : vector<2x64xf32>
    %79 = arith.mulf %74, %76 : vector<2x64xf32>
    %80 = arith.addf %78, %79 : vector<2x64xf32>
    %81 = math.tanh %80 : vector<2x64xf32>
    %82 = arith.mulf %77, %81 : vector<2x64xf32>
    %c0_38 = arith.constant 0 : index
    %c3 = arith.constant 3 : index
    %c0_39 = arith.constant 0 : index
    %83 = vector.load %arg9[%c0_38, %c3, %c0_39] : memref<2x8x256xf32, #tpu.memory_space<vmem>>, vector<2x1x256xf32>
    %84 = vector.shape_cast %83 : vector<2x1x256xf32> to vector<2x256xf32>
    %c0_40 = arith.constant 0 : index
    %c4 = arith.constant 4 : index
    %c0_41 = arith.constant 0 : index
    %85 = vector.load %arg10[%c0_40, %c4, %c0_41] : memref<2x8x256xf32, #tpu.memory_space<vmem>>, vector<2x1x256xf32>
    %86 = vector.shape_cast %85 : vector<2x1x256xf32> to vector<2x256xf32>
    %87 = arith.addf %84, %86 : vector<2x256xf32>
    %cst_42 = arith.constant dense<0.000000e+00> : vector<2x256xf32>
    %88 = tpu.matmul %82, %13, %cst_42 {dimension_numbers = #tpu.dot_dimension_numbers<[1], [0], [0], [1], [0, 0, 1, 1], [], []>} : vector<2x64xf32>, vector<64x256xf32>, vector<2x256xf32> -> vector<2x256xf32>
    %89 = arith.addf %87, %88 : vector<2x256xf32>
    %90 = arith.negf %89 : vector<2x256xf32>
    %91 = math.exp %90 : vector<2x256xf32>
    %cst_43 = arith.constant 1.000000e+00 : f32
    %92 = vector.broadcast %cst_43 : f32 to vector<2x256xf32>
    %93 = arith.addf %92, %91 : vector<2x256xf32>
    %94 = arith.divf %92, %93 : vector<2x256xf32>
    %95 = math.tanh %89 : vector<2x256xf32>
    %96 = vector.extract_strided_slice %94 {offsets = [0, 0], sizes = [2, 64], strides = [1, 1]} : vector<2x256xf32> to vector<2x64xf32>
    %97 = vector.extract_strided_slice %94 {offsets = [0, 64], sizes = [2, 64], strides = [1, 1]} : vector<2x256xf32> to vector<2x64xf32>
    %98 = vector.extract_strided_slice %95 {offsets = [0, 128], sizes = [2, 64], strides = [1, 1]} : vector<2x256xf32> to vector<2x64xf32>
    %99 = vector.extract_strided_slice %94 {offsets = [0, 192], sizes = [2, 64], strides = [1, 1]} : vector<2x256xf32> to vector<2x64xf32>
    %100 = arith.mulf %97, %80 : vector<2x64xf32>
    %101 = arith.mulf %96, %98 : vector<2x64xf32>
    %102 = arith.addf %100, %101 : vector<2x64xf32>
    %103 = math.tanh %102 : vector<2x64xf32>
    %104 = arith.mulf %99, %103 : vector<2x64xf32>
    %c0_44 = arith.constant 0 : index
    %c4_45 = arith.constant 4 : index
    %c0_46 = arith.constant 0 : index
    %105 = vector.load %arg9[%c0_44, %c4_45, %c0_46] : memref<2x8x256xf32, #tpu.memory_space<vmem>>, vector<2x1x256xf32>
    %106 = vector.shape_cast %105 : vector<2x1x256xf32> to vector<2x256xf32>
    %c0_47 = arith.constant 0 : index
    %c3_48 = arith.constant 3 : index
    %c0_49 = arith.constant 0 : index
    %107 = vector.load %arg10[%c0_47, %c3_48, %c0_49] : memref<2x8x256xf32, #tpu.memory_space<vmem>>, vector<2x1x256xf32>
    %108 = vector.shape_cast %107 : vector<2x1x256xf32> to vector<2x256xf32>
    %109 = arith.addf %106, %108 : vector<2x256xf32>
    %cst_50 = arith.constant dense<0.000000e+00> : vector<2x256xf32>
    %110 = tpu.matmul %104, %13, %cst_50 {dimension_numbers = #tpu.dot_dimension_numbers<[1], [0], [0], [1], [0, 0, 1, 1], [], []>} : vector<2x64xf32>, vector<64x256xf32>, vector<2x256xf32> -> vector<2x256xf32>
    %111 = arith.addf %109, %110 : vector<2x256xf32>
    %112 = arith.negf %111 : vector<2x256xf32>
    %113 = math.exp %112 : vector<2x256xf32>
    %cst_51 = arith.constant 1.000000e+00 : f32
    %114 = vector.broadcast %cst_51 : f32 to vector<2x256xf32>
    %115 = arith.addf %114, %113 : vector<2x256xf32>
    %116 = arith.divf %114, %115 : vector<2x256xf32>
    %117 = math.tanh %111 : vector<2x256xf32>
    %118 = vector.extract_strided_slice %116 {offsets = [0, 0], sizes = [2, 64], strides = [1, 1]} : vector<2x256xf32> to vector<2x64xf32>
    %119 = vector.extract_strided_slice %116 {offsets = [0, 64], sizes = [2, 64], strides = [1, 1]} : vector<2x256xf32> to vector<2x64xf32>
    %120 = vector.extract_strided_slice %117 {offsets = [0, 128], sizes = [2, 64], strides = [1, 1]} : vector<2x256xf32> to vector<2x64xf32>
    %121 = vector.extract_strided_slice %116 {offsets = [0, 192], sizes = [2, 64], strides = [1, 1]} : vector<2x256xf32> to vector<2x64xf32>
    %122 = arith.mulf %119, %102 : vector<2x64xf32>
    %123 = arith.mulf %118, %120 : vector<2x64xf32>
    %124 = arith.addf %122, %123 : vector<2x64xf32>
    %125 = math.tanh %124 : vector<2x64xf32>
    %126 = arith.mulf %121, %125 : vector<2x64xf32>
    %c0_52 = arith.constant 0 : index
    %c5_53 = arith.constant 5 : index
    %c0_54 = arith.constant 0 : index
    %127 = vector.load %arg9[%c0_52, %c5_53, %c0_54] : memref<2x8x256xf32, #tpu.memory_space<vmem>>, vector<2x1x256xf32>
    %128 = vector.shape_cast %127 : vector<2x1x256xf32> to vector<2x256xf32>
    %c0_55 = arith.constant 0 : index
    %c2_56 = arith.constant 2 : index
    %c0_57 = arith.constant 0 : index
    %129 = vector.load %arg10[%c0_55, %c2_56, %c0_57] : memref<2x8x256xf32, #tpu.memory_space<vmem>>, vector<2x1x256xf32>
    %130 = vector.shape_cast %129 : vector<2x1x256xf32> to vector<2x256xf32>
    %131 = arith.addf %128, %130 : vector<2x256xf32>
    %cst_58 = arith.constant dense<0.000000e+00> : vector<2x256xf32>
    %132 = tpu.matmul %126, %13, %cst_58 {dimension_numbers = #tpu.dot_dimension_numbers<[1], [0], [0], [1], [0, 0, 1, 1], [], []>} : vector<2x64xf32>, vector<64x256xf32>, vector<2x256xf32> -> vector<2x256xf32>
    %133 = arith.addf %131, %132 : vector<2x256xf32>
    %134 = arith.negf %133 : vector<2x256xf32>
    %135 = math.exp %134 : vector<2x256xf32>
    %cst_59 = arith.constant 1.000000e+00 : f32
    %136 = vector.broadcast %cst_59 : f32 to vector<2x256xf32>
    %137 = arith.addf %136, %135 : vector<2x256xf32>
    %138 = arith.divf %136, %137 : vector<2x256xf32>
    %139 = math.tanh %133 : vector<2x256xf32>
    %140 = vector.extract_strided_slice %138 {offsets = [0, 0], sizes = [2, 64], strides = [1, 1]} : vector<2x256xf32> to vector<2x64xf32>
    %141 = vector.extract_strided_slice %138 {offsets = [0, 64], sizes = [2, 64], strides = [1, 1]} : vector<2x256xf32> to vector<2x64xf32>
    %142 = vector.extract_strided_slice %139 {offsets = [0, 128], sizes = [2, 64], strides = [1, 1]} : vector<2x256xf32> to vector<2x64xf32>
    %143 = vector.extract_strided_slice %138 {offsets = [0, 192], sizes = [2, 64], strides = [1, 1]} : vector<2x256xf32> to vector<2x64xf32>
    %144 = arith.mulf %141, %124 : vector<2x64xf32>
    %145 = arith.mulf %140, %142 : vector<2x64xf32>
    %146 = arith.addf %144, %145 : vector<2x64xf32>
    %147 = math.tanh %146 : vector<2x64xf32>
    %148 = arith.mulf %143, %147 : vector<2x64xf32>
    %c0_60 = arith.constant 0 : index
    %c6_61 = arith.constant 6 : index
    %c0_62 = arith.constant 0 : index
    %149 = vector.load %arg9[%c0_60, %c6_61, %c0_62] : memref<2x8x256xf32, #tpu.memory_space<vmem>>, vector<2x1x256xf32>
    %150 = vector.shape_cast %149 : vector<2x1x256xf32> to vector<2x256xf32>
    %c0_63 = arith.constant 0 : index
    %c1_64 = arith.constant 1 : index
    %c0_65 = arith.constant 0 : index
    %151 = vector.load %arg10[%c0_63, %c1_64, %c0_65] : memref<2x8x256xf32, #tpu.memory_space<vmem>>, vector<2x1x256xf32>
    %152 = vector.shape_cast %151 : vector<2x1x256xf32> to vector<2x256xf32>
    %153 = arith.addf %150, %152 : vector<2x256xf32>
    %cst_66 = arith.constant dense<0.000000e+00> : vector<2x256xf32>
    %154 = tpu.matmul %148, %13, %cst_66 {dimension_numbers = #tpu.dot_dimension_numbers<[1], [0], [0], [1], [0, 0, 1, 1], [], []>} : vector<2x64xf32>, vector<64x256xf32>, vector<2x256xf32> -> vector<2x256xf32>
    %155 = arith.addf %153, %154 : vector<2x256xf32>
    %156 = arith.negf %155 : vector<2x256xf32>
    %157 = math.exp %156 : vector<2x256xf32>
    %cst_67 = arith.constant 1.000000e+00 : f32
    %158 = vector.broadcast %cst_67 : f32 to vector<2x256xf32>
    %159 = arith.addf %158, %157 : vector<2x256xf32>
    %160 = arith.divf %158, %159 : vector<2x256xf32>
    %161 = math.tanh %155 : vector<2x256xf32>
    %162 = vector.extract_strided_slice %160 {offsets = [0, 0], sizes = [2, 64], strides = [1, 1]} : vector<2x256xf32> to vector<2x64xf32>
    %163 = vector.extract_strided_slice %160 {offsets = [0, 64], sizes = [2, 64], strides = [1, 1]} : vector<2x256xf32> to vector<2x64xf32>
    %164 = vector.extract_strided_slice %161 {offsets = [0, 128], sizes = [2, 64], strides = [1, 1]} : vector<2x256xf32> to vector<2x64xf32>
    %165 = vector.extract_strided_slice %160 {offsets = [0, 192], sizes = [2, 64], strides = [1, 1]} : vector<2x256xf32> to vector<2x64xf32>
    %166 = arith.mulf %163, %146 : vector<2x64xf32>
    %167 = arith.mulf %162, %164 : vector<2x64xf32>
    %168 = arith.addf %166, %167 : vector<2x64xf32>
    %169 = math.tanh %168 : vector<2x64xf32>
    %170 = arith.mulf %165, %169 : vector<2x64xf32>
    %c0_68 = arith.constant 0 : index
    %c7_69 = arith.constant 7 : index
    %c0_70 = arith.constant 0 : index
    %171 = vector.load %arg9[%c0_68, %c7_69, %c0_70] : memref<2x8x256xf32, #tpu.memory_space<vmem>>, vector<2x1x256xf32>
    %172 = vector.shape_cast %171 : vector<2x1x256xf32> to vector<2x256xf32>
    %c0_71 = arith.constant 0 : index
    %c0_72 = arith.constant 0 : index
    %c0_73 = arith.constant 0 : index
    %173 = vector.load %arg10[%c0_71, %c0_72, %c0_73] : memref<2x8x256xf32, #tpu.memory_space<vmem>>, vector<2x1x256xf32>
    %174 = vector.shape_cast %173 : vector<2x1x256xf32> to vector<2x256xf32>
    %175 = arith.addf %172, %174 : vector<2x256xf32>
    %cst_74 = arith.constant dense<0.000000e+00> : vector<2x256xf32>
    %176 = tpu.matmul %170, %13, %cst_74 {dimension_numbers = #tpu.dot_dimension_numbers<[1], [0], [0], [1], [0, 0, 1, 1], [], []>} : vector<2x64xf32>, vector<64x256xf32>, vector<2x256xf32> -> vector<2x256xf32>
    %177 = arith.addf %175, %176 : vector<2x256xf32>
    %178 = arith.negf %177 : vector<2x256xf32>
    %179 = math.exp %178 : vector<2x256xf32>
    %cst_75 = arith.constant 1.000000e+00 : f32
    %180 = vector.broadcast %cst_75 : f32 to vector<2x256xf32>
    %181 = arith.addf %180, %179 : vector<2x256xf32>
    %182 = arith.divf %180, %181 : vector<2x256xf32>
    %183 = math.tanh %177 : vector<2x256xf32>
    %184 = vector.extract_strided_slice %182 {offsets = [0, 0], sizes = [2, 64], strides = [1, 1]} : vector<2x256xf32> to vector<2x64xf32>
    %185 = vector.extract_strided_slice %182 {offsets = [0, 64], sizes = [2, 64], strides = [1, 1]} : vector<2x256xf32> to vector<2x64xf32>
    %186 = vector.extract_strided_slice %183 {offsets = [0, 128], sizes = [2, 64], strides = [1, 1]} : vector<2x256xf32> to vector<2x64xf32>
    %187 = vector.extract_strided_slice %182 {offsets = [0, 192], sizes = [2, 64], strides = [1, 1]} : vector<2x256xf32> to vector<2x64xf32>
    %188 = arith.mulf %185, %168 : vector<2x64xf32>
    %189 = arith.mulf %184, %186 : vector<2x64xf32>
    %190 = arith.addf %188, %189 : vector<2x64xf32>
    %191 = math.tanh %190 : vector<2x64xf32>
    %192 = arith.mulf %187, %191 : vector<2x64xf32>
    %193 = vector.extract_strided_slice %192 {offsets = [0, 0], sizes = [2, 32], strides = [1, 1]} : vector<2x64xf32> to vector<2x32xf32>
    %194 = tpu.concatenate %193, %38 in 1 : vector<2x32xf32>, vector<2x32xf32> -> vector<2x64xf32>
    %c0_76 = arith.constant 0 : index
    %c0_77 = arith.constant 0 : index
    %195 = vector.load %arg8[%c0_76, %c0_77] : memref<2x64xf32, #tpu.memory_space<vmem>>, vector<2x64xf32>
    tpu.vector_store %arg8[%c0_76, %c0_77], %194 {strides = array<i32>} : memref<2x64xf32, #tpu.memory_space<vmem>>, vector<2x64xf32>,
    %c0_78 = arith.constant 0 : index
    %c0_79 = arith.constant 0 : index
    %196 = vector.load %arg5[%c0_78, %c0_79] : memref<64x2xf32, #tpu.memory_space<vmem>>, vector<64x2xf32>
    %cst_80 = arith.constant dense<0.000000e+00> : vector<2x2xf32>
    %197 = tpu.matmul %194, %196, %cst_80 {dimension_numbers = #tpu.dot_dimension_numbers<[1], [0], [0], [1], [0, 0, 1, 1], [], []>} : vector<2x64xf32>, vector<64x2xf32>, vector<2x2xf32> -> vector<2x2xf32>
    %c0_81 = arith.constant 0 : index
    %c0_82 = arith.constant 0 : index
    %198 = vector.load %arg6[%c0_81, %c0_82] : memref<1x2xf32, #tpu.memory_space<vmem>>, vector<1x2xf32>
    %199 = vector.broadcast %198 : vector<1x2xf32> to vector<2x2xf32>
    %200 = arith.addf %197, %199 : vector<2x2xf32>
    %cst_83 = arith.constant dense<0xFF800000> : vector<2xf32>
    %201 = vector.multi_reduction <maximumf>, %200, %cst_83 [1] : vector<2x2xf32> to vector<2xf32>
    %202 = vector.shape_cast %201 : vector<2xf32> to vector<2x1xf32>
    %203 = vector.broadcast %202 : vector<2x1xf32> to vector<2x2xf32>
    %204 = arith.subf %200, %203 : vector<2x2xf32>
    %205 = math.exp %204 : vector<2x2xf32>
    %cst_84 = arith.constant dense<0.000000e+00> : vector<2xf32>
    %206 = vector.multi_reduction <add>, %205, %cst_84 [1] : vector<2x2xf32> to vector<2xf32>
    %207 = vector.shape_cast %206 : vector<2xf32> to vector<2x1xf32>
    %208 = vector.broadcast %207 : vector<2x1xf32> to vector<2x2xf32>
    %209 = arith.divf %205, %208 : vector<2x2xf32>
    %c0_85 = arith.constant 0 : index
    %c0_86 = arith.constant 0 : index
    %210 = vector.load %arg7[%c0_85, %c0_86] : memref<2x2xf32, #tpu.memory_space<vmem>>, vector<2x2xf32>
    tpu.vector_store %arg7[%c0_85, %c0_86], %209 {strides = array<i32>} : memref<2x2xf32, #tpu.memory_space<vmem>>, vector<2x2xf32>,
    return
  }
}

</mosaic_0001>

<llo_original>
// kernel: lstm_model_forward.1
$region0: #{lstm_model_forward.1}
  #allocation0 [shape = 'u32[]', space=smem, size = 0x4, offset = 0x4, fixed_abs, tag = 'smem constant byte address 0x4 - core index']
  #allocation1 [shape = 'u32[144,128]{1,0:T(1,128)}', space=vmem, size = 0x12000, scoped, tag = 'internal scratch']
  #allocation2 [shape = 'f32[2,8,256]{2,1,0:T(8,128)}', space=vmem, size = 0x4000, scoped, tag = 'scratch operand']
  #allocation3 [shape = 'f32[2,8,256]{2,1,0:T(8,128)}', space=vmem, size = 0x4000, scoped, tag = 'scratch operand']
  %s0 = inlined_call_operand.vmem [shape: f32[2,8,8], index: 0, kind: input, shape index: {}]
  %s1 = inlined_call_operand.vmem [shape: f32[8,256], index: 1, kind: input, shape index: {}]
  %s2 = inlined_call_operand.vmem [shape: f32[8,256], index: 2, kind: input, shape index: {}]
  %s3 = inlined_call_operand.hbm [shape: f32[64,256], index: 3, kind: input, shape index: {}]
  %s4 = inlined_call_operand.vmem [shape: f32[1,256], index: 4, kind: input, shape index: {}]
  %s5 = inlined_call_operand.vmem [shape: f32[64,2], index: 5, kind: input, shape index: {}]
  %s6 = inlined_call_operand.vmem [shape: f32[1,2], index: 6, kind: input, shape index: {}]
  %s7 = inlined_call_operand.vmem [shape: f32[2,2], index: 7, kind: output, shape index: {0}]
  %s8 = inlined_call_operand.hbm [shape: f32[2,64], index: 8, kind: output, shape index: {1}]
  %9 = xla_tuple %s7, %s8
  %s10 = sld [smem:[#allocation0]]
  $region50: #{lstm_model_forward.1} parent=0
    _
  %s12 = ssub.s32 1, %s10
  %s13 = scalar_select 0, %s12, %s10
  $region1: #{lstm_model_forward.1} parent=0
    #allocation4 [shape = 'u8[65536]{0}', space=vmem, size = 0x10000, scoped, tag = 'input window, operand 3, single buffered']
    #allocation5 [shape = 's32[1]{0}', space=sflag, size = 0x4, scoped, tag = 'scoped memory for lstm_model_forward.1']
    #allocation6 [shape = 's32[1]{0}', space=sflag, size = 0x4, scoped, tag = 'scoped memory for lstm_model_forward.1']
    #allocation7 [shape = 'u8[1024]{0}', space=vmem, size = 0x400, scoped, tag = 'output window, operand 1, single buffered']
    %14 = vsyncpa [#allocation5], 0
    %15 = vsyncpa [#allocation6], 0
    // Predicated region
    $region2: #{lstm_model_forward.1} parent=1 // pred_check
      _
    $region3: #{lstm_model_forward.1} parent=1 // pred_check_branch
      %17 = sbr.rel (0) target = $region5
    $region4: #{lstm_model_forward.1} parent=1 // pred_region
      _
    $region5: #{lstm_model_forward.1} parent=1 // pred_fallthru
      _
    // Predicated region
    $region6: #{lstm_model_forward.1} parent=1 // pred_check
      _
    $region7: #{lstm_model_forward.1} parent=1 // pred_check_branch
      %19 = sbr.rel (0) target = $region9
    $region8: #{lstm_model_forward.1} parent=1 // pred_region
      _
    $region9: #{lstm_model_forward.1} parent=1 // pred_fallthru
      _
    // Predicated region
    $region10: #{lstm_model_forward.1} parent=1 // pred_check
      _
    $region11: #{lstm_model_forward.1} parent=1 // pred_check_branch
      %21 = sbr.rel (0) target = $region13
    $region12: #{lstm_model_forward.1} parent=1 // pred_region
      _
    $region13: #{lstm_model_forward.1} parent=1 // pred_fallthru
      _
    // Predicated region
    $region14: #{lstm_model_forward.1} parent=1 // pred_check
      _
    $region15: #{lstm_model_forward.1} parent=1 // pred_check_branch
      %23 = sbr.rel (0) target = $region17
    $region16: #{lstm_model_forward.1} parent=1 // pred_region
      %s25 = ssub.s32 2048, 2048
      %26 = vsyncadd [#allocation5], %s25
      %s27 = sshll.u32 [#allocation4], 4
      %s28 = int_to_ptr.vmem [resolvable:$true] %s27
      %33 = dma.hbm_to_vmem [thread:$0]  %s3, 2048, %s28, [#allocation5], 256, 256, 16
    $region17: #{lstm_model_forward.1} parent=1 // pred_fallthru
      _
    // Predicated region
    $region18: #{lstm_model_forward.1} parent=1 // pred_check
      _
    $region19: #{lstm_model_forward.1} parent=1 // pred_check_branch
      %35 = sbr.rel (0) target = $region21
    $region20: #{lstm_model_forward.1} parent=1 // pred_region
      _
    $region21: #{lstm_model_forward.1} parent=1 // pred_fallthru
      _
    // Predicated region
    $region22: #{lstm_model_forward.1} parent=1 // pred_check
      _
    $region23: #{lstm_model_forward.1} parent=1 // pred_check_branch
      %37 = sbr.rel (0) target = $region25
    $region24: #{lstm_model_forward.1} parent=1 // pred_region
      _
    $region25: #{lstm_model_forward.1} parent=1 // pred_fallthru
      _
    // Predicated region
    $region26: #{lstm_model_forward.1} parent=1 // pred_check
      _
    $region27: #{lstm_model_forward.1} parent=1 // pred_check_branch
      %39 = sbr.rel (0) target = $region29
    $region28: #{lstm_model_forward.1} parent=1 // pred_region
      _
    $region29: #{lstm_model_forward.1} parent=1 // pred_fallthru
      _
    // Predicated region
    $region30: #{lstm_model_forward.1} parent=1 // pred_check
      _
    $region31: #{lstm_model_forward.1} parent=1 // pred_check_branch
      %41 = sbr.rel (0) target = $region33
    $region32: #{lstm_model_forward.1} parent=1 // pred_region
      %42 = dma.done [#allocation5], 2048
    $region33: #{lstm_model_forward.1} parent=1 // pred_fallthru
      _
    %v43 = vld [vmem:[%s0] sm:$0xff]
    %v44 = vld [vmem:[%s0 + $0x8] sm:$0xff]
    %v45 = vld [vmem:[%s1] sm:$0xff]
    %v46 = vld [vmem:[%s1 + $0x8] sm:$0xff]
    %v47 = vld [vmem:[%s4] sm:$0x3]
    %v49 = vlaneseq
    %v50 = vshrl.u32 %v49, 7
    %v51 = vsub.s32 0, %v50
    %v52 = vrot.slane %v47, %v51
    %v53 = vlaneseq
    %v54 = vshrl.u32 %v53, 7
    %v55 = vsub.s32 1, %v54
    %v56 = vrot.slane %v47, %v55
    %vm59 = vcmask 64512
    %v61 = vsel %vm59, %v43, 0
    %v64 = vsel %vm59, %v44, 0
    %66 = vmatprep.subr.mxu0 0.0
    %67 = vmatpush1.msra.mxu0 0.0
    %68 = vmatprep.subr.mxu0 0.0
    %69 = vmatpush1.msra.mxu0 0.0
    %70 = vmatprep.subr.mxu0 0.0
    %71 = vmatpush1.msra.mxu0 0.0
    %72 = vmatprep.subr.mxu0 0.0
    %73 = vmatpush1.msra.mxu0 0.0
    %74 = vmatprep.subr.mxu0 0.0
    %75 = vmatpush1.msra.mxu0 0.0
    %76 = vmatprep.subr.mxu0 0.0
    %77 = vmatpush1.msra.mxu0 0.0
    %78 = vmatprep.subr.mxu0 0.0
    %79 = vmatpush1.msra.mxu0 0.0
    %80 = vmatprep.subr.mxu0 0.0
    %81 = vmatpush1.msra.mxu0 0.0
    %82 = vmatprep.subr.mxu0 0.0
    %83 = vmatpush1.msra.mxu0 0.0
    %84 = vmatprep.subr.mxu0 0.0
    %85 = vmatpush1.msra.mxu0 0.0
    %86 = vmatprep.subr.mxu0 0.0
    %87 = vmatpush1.msra.mxu0 0.0
    %88 = vmatprep.subr.mxu0 0.0
    %89 = vmatpush1.msra.mxu0 0.0
    %90 = vmatprep.subr.mxu0 0.0
    %91 = vmatpush1.msra.mxu0 0.0
    %92 = vmatprep.subr.mxu0 0.0
    %93 = vmatpush1.msra.mxu0 0.0
    %94 = vmatprep.subr.mxu0 0.0
    %95 = vmatpush1.msra.mxu0 0.0
    %96 = vmatprep.subr.mxu0 %v46
    %97 = vmatpush1.msra.mxu0 %v45
    %98 = vmatprep.subr.mxu0 0.0
    %99 = vmatpush2.msra.mxu0 0.0
    %100 = vmatprep.subr.mxu0 0.0
    %101 = vmatpush2.msra.mxu0 0.0
    %102 = vmatprep.subr.mxu0 0.0
    %103 = vmatpush2.msra.mxu0 0.0
    %104 = vmatprep.subr.mxu0 0.0
    %105 = vmatpush2.msra.mxu0 0.0
    %106 = vmatprep.subr.mxu0 0.0
    %107 = vmatpush2.msra.mxu0 0.0
    %108 = vmatprep.subr.mxu0 0.0
    %109 = vmatpush2.msra.mxu0 0.0
    %110 = vmatprep.subr.mxu0 0.0
    %111 = vmatpush2.msra.mxu0 0.0
    %112 = vmatprep.subr.mxu0 0.0
    %113 = vmatpush2.msra.mxu0 0.0
    %114 = vmatprep.subr.mxu0 0.0
    %115 = vmatpush2.msra.mxu0 0.0
    %116 = vmatprep.subr.mxu0 0.0
    %117 = vmatpush2.msra.mxu0 0.0
    %118 = vmatprep.subr.mxu0 0.0
    %119 = vmatpush2.msra.mxu0 0.0
    %120 = vmatprep.subr.mxu0 0.0
    %121 = vmatpush2.msra.mxu0 0.0
    %122 = vmatprep.subr.mxu0 0.0
    %123 = vmatpush2.msra.mxu0 0.0
    %124 = vmatprep.subr.mxu0 0.0
    %125 = vmatpush2.msra.mxu0 0.0
    %126 = vmatprep.subr.mxu0 0.0
    %127 = vmatpush2.msra.mxu0 0.0
    %128 = vmatprep.subr.mxu0 0.0
    %129 = vmatpush2.msra.mxu0 0.0
    %130 = vmatprep.mubr.f32.mxu0 0.0
    %131 = vmatmul.mubr.f32.gmra.mxu0 %v61
    %v132 = vpop.f32.mrf.mxu0
    %v133 = vadd.f32 %v52, %v132
    %v134 = vpop.f32.mrf.mxu0
    %v135 = vadd.f32 %v56, %v134
    %136 = vmatprep.mubr.f32.mxu0 0.0
    %137 = vmatmul.mubr.f32.gmra.mxu0 %v64
    %v138 = vpop.f32.mrf.mxu0
    %v139 = vadd.f32 %v52, %v138
    %v140 = vpop.f32.mrf.mxu0
    %v141 = vadd.f32 %v56, %v140
    %142 = vdwg.mxu0
    %v143 = vld [vmem:[%s2] sm:$0xff]
    %v144 = vld [vmem:[%s2 + $0x8] sm:$0xff]
    %145 = vmatprep.subr.mxu0 0.0
    %146 = vmatpush1.msra.mxu0 0.0
    %147 = vmatprep.subr.mxu0 0.0
    %148 = vmatpush1.msra.mxu0 0.0
    %149 = vmatprep.subr.mxu0 0.0
    %150 = vmatpush1.msra.mxu0 0.0
    %151 = vmatprep.subr.mxu0 0.0
    %152 = vmatpush1.msra.mxu0 0.0
    %153 = vmatprep.subr.mxu0 0.0
    %154 = vmatpush1.msra.mxu0 0.0
    %155 = vmatprep.subr.mxu0 0.0
    %156 = vmatpush1.msra.mxu0 0.0
    %157 = vmatprep.subr.mxu0 0.0
    %158 = vmatpush1.msra.mxu0 0.0
    %159 = vmatprep.subr.mxu0 0.0
    %160 = vmatpush1.msra.mxu0 0.0
    %161 = vmatprep.subr.mxu0 0.0
    %162 = vmatpush1.msra.mxu0 0.0
    %163 = vmatprep.subr.mxu0 0.0
    %164 = vmatpush1.msra.mxu0 0.0
    %165 = vmatprep.subr.mxu0 0.0
    %166 = vmatpush1.msra.mxu0 0.0
    %167 = vmatprep.subr.mxu0 0.0
    %168 = vmatpush1.msra.mxu0 0.0
    %169 = vmatprep.subr.mxu0 0.0
    %170 = vmatpush1.msra.mxu0 0.0
    %171 = vmatprep.subr.mxu0 0.0
    %172 = vmatpush1.msra.mxu0 0.0
    %173 = vmatprep.subr.mxu0 0.0
    %174 = vmatpush1.msra.mxu0 0.0
    %175 = vmatprep.subr.mxu0 %v144
    %176 = vmatpush1.msra.mxu0 %v143
    %177 = vmatprep.subr.mxu0 0.0
    %178 = vmatpush2.msra.mxu0 0.0
    %179 = vmatprep.subr.mxu0 0.0
    %180 = vmatpush2.msra.mxu0 0.0
    %181 = vmatprep.subr.mxu0 0.0
    %182 = vmatpush2.msra.mxu0 0.0
    %183 = vmatprep.subr.mxu0 0.0
    %184 = vmatpush2.msra.mxu0 0.0
    %185 = vmatprep.subr.mxu0 0.0
    %186 = vmatpush2.msra.mxu0 0.0
    %187 = vmatprep.subr.mxu0 0.0
    %188 = vmatpush2.msra.mxu0 0.0
    %189 = vmatprep.subr.mxu0 0.0
    %190 = vmatpush2.msra.mxu0 0.0
    %191 = vmatprep.subr.mxu0 0.0
    %192 = vmatpush2.msra.mxu0 0.0
    %193 = vmatprep.subr.mxu0 0.0
    %194 = vmatpush2.msra.mxu0 0.0
    %195 = vmatprep.subr.mxu0 0.0
    %196 = vmatpush2.msra.mxu0 0.0
    %197 = vmatprep.subr.mxu0 0.0
    %198 = vmatpush2.msra.mxu0 0.0
    %199 = vmatprep.subr.mxu0 0.0
    %200 = vmatpush2.msra.mxu0 0.0
    %201 = vmatprep.subr.mxu0 0.0
    %202 = vmatpush2.msra.mxu0 0.0
    %203 = vmatprep.subr.mxu0 0.0
    %204 = vmatpush2.msra.mxu0 0.0
    %205 = vmatprep.subr.mxu0 0.0
    %206 = vmatpush2.msra.mxu0 0.0
    %207 = vmatprep.subr.mxu0 0.0
    %208 = vmatpush2.msra.mxu0 0.0
    %209 = vmatprep.mubr.f32.mxu0 0.0
    %210 = vmatmul.mubr.f32.gmra.mxu0 %v61
    %v211 = vpop.f32.mrf.mxu0
    %v212 = vadd.f32 0.0, %v211
    %v213 = vpop.f32.mrf.mxu0
    %v214 = vadd.f32 0.0, %v213
    %215 = vmatprep.mubr.f32.mxu0 0.0
    %216 = vmatmul.mubr.f32.gmra.mxu0 %v64
    %v217 = vpop.f32.mrf.mxu0
    %v218 = vadd.f32 0.0, %v217
    %v219 = vpop.f32.mrf.mxu0
    %v220 = vadd.f32 0.0, %v219
    %221 = vdwg.mxu0
    %222 = vst [vmem:[#allocation2] sm:$0xff] %v133
    %223 = vst [vmem:[#allocation2 + $0x8] sm:$0xff] %v135
    %224 = vst [vmem:[#allocation2 + $0x10] sm:$0xff] %v139
    %225 = vst [vmem:[#allocation2 + $0x18] sm:$0xff] %v141
    %226 = vst [vmem:[#allocation3] sm:$0xff] %v212
    %227 = vst [vmem:[#allocation3 + $0x8] sm:$0xff] %v214
    %228 = vst [vmem:[#allocation3 + $0x10] sm:$0xff] %v218
    %229 = vst [vmem:[#allocation3 + $0x18] sm:$0xff] %v220
    %v230 = vld [vmem:[#allocation4] sm:$0xff]
    %v231 = vld [vmem:[#allocation4 + $0x8] sm:$0xff]
    %v232 = vld [vmem:[#allocation4 + $0x10] sm:$0xff]
    %v233 = vld [vmem:[#allocation4 + $0x18] sm:$0xff]
    %v234 = vld [vmem:[#allocation4 + $0x20] sm:$0xff]
    %v235 = vld [vmem:[#allocation4 + $0x28] sm:$0xff]
    %v236 = vld [vmem:[#allocation4 + $0x30] sm:$0xff]
    %v237 = vld [vmem:[#allocation4 + $0x38] sm:$0xff]
    %v238 = vld [vmem:[#allocation4 + $0x40] sm:$0xff]
    %v239 = vld [vmem:[#allocation4 + $0x48] sm:$0xff]
    %v240 = vld [vmem:[#allocation4 + $0x50] sm:$0xff]
    %v241 = vld [vmem:[#allocation4 + $0x58] sm:$0xff]
    %v242 = vld [vmem:[#allocation4 + $0x60] sm:$0xff]
    %v243 = vld [vmem:[#allocation4 + $0x68] sm:$0xff]
    %v244 = vld [vmem:[#allocation4 + $0x70] sm:$0xff]
    %v245 = vld [vmem:[#allocation4 + $0x78] sm:$0xff]
    %v246 = vld [vmem:[#allocation2] ss:$8 sm:$0x3]
    %s247 = scalar_lea.vmem [#allocation2], 16
    %v248 = vld [vmem:[%s247] ss:$8 sm:$0x3]
    %s249 = scalar_lea.vmem [#allocation3], 7
    %v250 = vld [vmem:[%s249] ss:$8 sm:$0x3]
    %s251 = scalar_lea.vmem [#allocation3], 23
    %v252 = vld [vmem:[%s251] ss:$8 sm:$0x3]
    %v253 = vadd.f32 %v246, %v250
    %v254 = vadd.f32 %v248, %v252
    %vm255 = vcmask 523264
    %v257 = vsel %vm255, 0.0, 0
    %259 = vmatprep.subr.mxu0 0.0
    %260 = vmatpush1.msra.mxu0 0.0
    %261 = vmatprep.subr.mxu0 0.0
    %262 = vmatpush1.msra.mxu0 0.0
    %263 = vmatprep.subr.mxu0 0.0
    %264 = vmatpush1.msra.mxu0 0.0
    %265 = vmatprep.subr.mxu0 0.0
    %266 = vmatpush1.msra.mxu0 0.0
    %267 = vmatprep.subr.mxu0 0.0
    %268 = vmatpush1.msra.mxu0 0.0
    %269 = vmatprep.subr.mxu0 0.0
    %270 = vmatpush1.msra.mxu0 0.0
    %271 = vmatprep.subr.mxu0 0.0
    %272 = vmatpush1.msra.mxu0 0.0
    %273 = vmatprep.subr.mxu0 0.0
    %274 = vmatpush1.msra.mxu0 0.0
    %275 = vmatprep.subr.mxu0 %v245
    %276 = vmatpush1.msra.mxu0 %v244
    %277 = vmatprep.subr.mxu0 %v243
    %278 = vmatpush1.msra.mxu0 %v242
    %279 = vmatprep.subr.mxu0 %v241
    %280 = vmatpush1.msra.mxu0 %v240
    %281 = vmatprep.subr.mxu0 %v239
    %282 = vmatpush1.msra.mxu0 %v238
    %283 = vmatprep.subr.mxu0 %v237
    %284 = vmatpush1.msra.mxu0 %v236
    %285 = vmatprep.subr.mxu0 %v235
    %286 = vmatpush1.msra.mxu0 %v234
    %287 = vmatprep.subr.mxu0 %v233
    %288 = vmatpush1.msra.mxu0 %v232
    %289 = vmatprep.subr.mxu0 %v231
    %290 = vmatpush1.msra.mxu0 %v230
    %291 = vmatprep.subr.mxu0 0.0
    %292 = vmatpush2.msra.mxu0 0.0
    %293 = vmatprep.subr.mxu0 0.0
    %294 = vmatpush2.msra.mxu0 0.0
    %295 = vmatprep.subr.mxu0 0.0
    %296 = vmatpush2.msra.mxu0 0.0
    %297 = vmatprep.subr.mxu0 0.0
    %298 = vmatpush2.msra.mxu0 0.0
    %299 = vmatprep.subr.mxu0 0.0
    %300 = vmatpush2.msra.mxu0 0.0
    %301 = vmatprep.subr.mxu0 0.0
    %302 = vmatpush2.msra.mxu0 0.0
    %303 = vmatprep.subr.mxu0 0.0
    %304 = vmatpush2.msra.mxu0 0.0
    %305 = vmatprep.subr.mxu0 0.0
    %306 = vmatpush2.msra.mxu0 0.0
    %307 = vmatprep.subr.mxu0 0.0
    %308 = vmatpush2.msra.mxu0 0.0
    %309 = vmatprep.subr.mxu0 0.0
    %310 = vmatpush2.msra.mxu0 0.0
    %311 = vmatprep.subr.mxu0 0.0
    %312 = vmatpush2.msra.mxu0 0.0
    %313 = vmatprep.subr.mxu0 0.0
    %314 = vmatpush2.msra.mxu0 0.0
    %315 = vmatprep.subr.mxu0 0.0
    %316 = vmatpush2.msra.mxu0 0.0
    %317 = vmatprep.subr.mxu0 0.0
    %318 = vmatpush2.msra.mxu0 0.0
    %319 = vmatprep.subr.mxu0 0.0
    %320 = vmatpush2.msra.mxu0 0.0
    %321 = vmatprep.subr.mxu0 0.0
    %322 = vmatpush2.msra.mxu0 0.0
    %323 = vmatprep.mubr.f32.mxu0 0.0
    %324 = vmatmul.mubr.f32.gmra.mxu0 %v257
    %v325 = vpop.f32.mrf.mxu0
    %v326 = vadd.f32 0.0, %v325
    %v327 = vpop.f32.mrf.mxu0
    %v328 = vadd.f32 0.0, %v327
    %329 = vdwg.mxu0
    %v332 = vcombine.low %v326, %v328
    %v334 = vunpack.c.l.s4 1966171168
    %v335 = vunpack.c.0.s8 %v334
    %v336 = vlaneseq
    %v337 = vshrl.u32 %v336, 7
    %v338 = vsub.s32 %v335, %v337
    %v339 = vrot.slane %v332, %v338
    %v340 = vcombine.high %v339, %v339
    %v342 = vunpack.c.l.s4 1966171168
    %v343 = vunpack.c.0.s8 %v342
    %v344 = vlaneseq
    %v345 = vshrl.u32 %v344, 7
    %v346 = vsub.s32 %v343, %v345
    %v347 = vrot.slane %v339, %v346
    %v349 = vunpack.c.l.s4 1966171168
    %v350 = vunpack.c.0.s8 %v349
    %v351 = vlaneseq
    %v352 = vshrl.u32 %v351, 7
    %v353 = vsub.s32 %v350, %v352
    %v354 = vrot.slane %v340, %v353
    %v357 = vadd.f32 %v253, %v347
    %v358 = vadd.f32 %v254, %v354
    %v359 = vxor.u32 %v357, 2147483648
    %v360 = vxor.u32 %v358, 2147483648
    %v361 = vmul.f32 %v359, 1.442695
    %v362 = vpow.pop %v361
    %v363 = vmul.f32 %v360, 1.442695
    %v364 = vpow.pop %v363
    %v365 = vadd.f32 %v362, 1.0
    %v366 = vadd.f32 %v364, 1.0
    %v367 = vrcp.pop %v365
    %v368 = vmul.f32 1.0, %v367
    %v369 = vrcp.pop %v366
    %v370 = vmul.f32 1.0, %v369
    %v371 = vtanh.pop %v357
    %v372 = vtanh.pop %v358
    %v373 = vmul.f32 %v368, 0.0
    %v374 = vmul.f32 %v370, 0.0
    %v377 = vrot.slane %v371, 1
    %v378 = vrot.slane %v372, 1
    %v381 = vmul.f32 %v368, %v377
    %v382 = vmul.f32 %v370, %v378
    %385 = vrot.lane.b32.xlu0 %v381, 64
    %v386 = vpop.permute.xlu0 %385
    %387 = vrot.lane.b32.xlu0 %v382, 64
    %v388 = vpop.permute.xlu0 %387
    %v391 = vadd.f32 %v373, %v386
    %v392 = vadd.f32 %v374, %v388
    %v393 = vtanh.pop %v391
    %v394 = vtanh.pop %v392
    %397 = vrot.lane.b32.xlu0 %v368, 64
    %v398 = vpop.permute.xlu0 %397
    %399 = vrot.lane.b32.xlu0 %v370, 64
    %v400 = vpop.permute.xlu0 %399
    %v401 = vrot.slane %v398, 1
    %v402 = vrot.slane %v400, 1
    %407 = vrot.lane.b32.xlu0 %v393, 64
    %v408 = vpop.permute.xlu0 %407
    %409 = vrot.lane.b32.xlu0 %v394, 64
    %v410 = vpop.permute.xlu0 %409
    %v413 = vmul.f32 %v401, %v408
    %v414 = vmul.f32 %v402, %v410
    %s415 = scalar_lea.vmem [#allocation2], 1
    %v416 = vld [vmem:[%s415] ss:$8 sm:$0x3]
    %s417 = scalar_lea.vmem [#allocation2], 17
    %v418 = vld [vmem:[%s417] ss:$8 sm:$0x3]
    %s419 = scalar_lea.vmem [#allocation3], 6
    %v420 = vld [vmem:[%s419] ss:$8 sm:$0x3]
    %s421 = scalar_lea.vmem [#allocation3], 22
    %v422 = vld [vmem:[%s421] ss:$8 sm:$0x3]
    %v423 = vadd.f32 %v416, %v420
    %v424 = vadd.f32 %v418, %v422
    %v427 = vcombine.low %v413, %v414
    %v429 = vunpack.c.l.s4 1966171168
    %v430 = vunpack.c.0.s8 %v429
    %v431 = vlaneseq
    %v432 = vshrl.u32 %v431, 7
    %v433 = vsub.s32 %v430, %v432
    %v434 = vrot.slane %v427, %v433
    %v436 = vunpack.c.l.s4 1966171168
    %v437 = vunpack.c.0.s8 %v436
    %v438 = vlaneseq
    %v439 = vshrl.u32 %v438, 7
    %v440 = vsub.s32 %v437, %v439
    %v441 = vrot.slane %v434, %v440
    %v442 = vsel %vm255, %v441, 0
    %444 = vmatprep.subr.mxu0 0.0
    %445 = vmatpush1.msra.mxu0 0.0
    %446 = vmatprep.subr.mxu0 0.0
    %447 = vmatpush1.msra.mxu0 0.0
    %448 = vmatprep.subr.mxu0 0.0
    %449 = vmatpush1.msra.mxu0 0.0
    %450 = vmatprep.subr.mxu0 0.0
    %451 = vmatpush1.msra.mxu0 0.0
    %452 = vmatprep.subr.mxu0 0.0
    %453 = vmatpush1.msra.mxu0 0.0
    %454 = vmatprep.subr.mxu0 0.0
    %455 = vmatpush1.msra.mxu0 0.0
    %456 = vmatprep.subr.mxu0 0.0
    %457 = vmatpush1.msra.mxu0 0.0
    %458 = vmatprep.subr.mxu0 0.0
    %459 = vmatpush1.msra.mxu0 0.0
    %460 = vmatprep.subr.mxu0 %v245
    %461 = vmatpush1.msra.mxu0 %v244
    %462 = vmatprep.subr.mxu0 %v243
    %463 = vmatpush1.msra.mxu0 %v242
    %464 = vmatprep.subr.mxu0 %v241
    %465 = vmatpush1.msra.mxu0 %v240
    %466 = vmatprep.subr.mxu0 %v239
    %467 = vmatpush1.msra.mxu0 %v238
    %468 = vmatprep.subr.mxu0 %v237
    %469 = vmatpush1.msra.mxu0 %v236
    %470 = vmatprep.subr.mxu0 %v235
    %471 = vmatpush1.msra.mxu0 %v234
    %472 = vmatprep.subr.mxu0 %v233
    %473 = vmatpush1.msra.mxu0 %v232
    %474 = vmatprep.subr.mxu0 %v231
    %475 = vmatpush1.msra.mxu0 %v230
    %476 = vmatprep.subr.mxu0 0.0
    %477 = vmatpush2.msra.mxu0 0.0
    %478 = vmatprep.subr.mxu0 0.0
    %479 = vmatpush2.msra.mxu0 0.0
    %480 = vmatprep.subr.mxu0 0.0
    %481 = vmatpush2.msra.mxu0 0.0
    %482 = vmatprep.subr.mxu0 0.0
    %483 = vmatpush2.msra.mxu0 0.0
    %484 = vmatprep.subr.mxu0 0.0
    %485 = vmatpush2.msra.mxu0 0.0
    %486 = vmatprep.subr.mxu0 0.0
    %487 = vmatpush2.msra.mxu0 0.0
    %488 = vmatprep.subr.mxu0 0.0
    %489 = vmatpush2.msra.mxu0 0.0
    %490 = vmatprep.subr.mxu0 0.0
    %491 = vmatpush2.msra.mxu0 0.0
    %492 = vmatprep.subr.mxu0 0.0
    %493 = vmatpush2.msra.mxu0 0.0
    %494 = vmatprep.subr.mxu0 0.0
    %495 = vmatpush2.msra.mxu0 0.0
    %496 = vmatprep.subr.mxu0 0.0
    %497 = vmatpush2.msra.mxu0 0.0
    %498 = vmatprep.subr.mxu0 0.0
    %499 = vmatpush2.msra.mxu0 0.0
    %500 = vmatprep.subr.mxu0 0.0
    %501 = vmatpush2.msra.mxu0 0.0
    %502 = vmatprep.subr.mxu0 0.0
    %503 = vmatpush2.msra.mxu0 0.0
    %504 = vmatprep.subr.mxu0 0.0
    %505 = vmatpush2.msra.mxu0 0.0
    %506 = vmatprep.subr.mxu0 0.0
    %507 = vmatpush2.msra.mxu0 0.0
    %508 = vmatprep.mubr.f32.mxu0 0.0
    %509 = vmatmul.mubr.f32.gmra.mxu0 %v442
    %v510 = vpop.f32.mrf.mxu0
    %v511 = vadd.f32 0.0, %v510
    %v512 = vpop.f32.mrf.mxu0
    %v513 = vadd.f32 0.0, %v512
    %514 = vdwg.mxu0
    %v517 = vcombine.low %v511, %v513
    %v519 = vunpack.c.l.s4 1966171168
    %v520 = vunpack.c.0.s8 %v519
    %v521 = vlaneseq
    %v522 = vshrl.u32 %v521, 7
    %v523 = vsub.s32 %v520, %v522
    %v524 = vrot.slane %v517, %v523
    %v525 = vcombine.high %v524, %v524
    %v527 = vunpack.c.l.s4 1966171168
    %v528 = vunpack.c.0.s8 %v527
    %v529 = vlaneseq
    %v530 = vshrl.u32 %v529, 7
    %v531 = vsub.s32 %v528, %v530
    %v532 = vrot.slane %v524, %v531
    %v534 = vunpack.c.l.s4 1966171168
    %v535 = vunpack.c.0.s8 %v534
    %v536 = vlaneseq
    %v537 = vshrl.u32 %v536, 7
    %v538 = vsub.s32 %v535, %v537
    %v539 = vrot.slane %v525, %v538
    %v542 = vadd.f32 %v423, %v532
    %v543 = vadd.f32 %v424, %v539
    %v544 = vxor.u32 %v542, 2147483648
    %v545 = vxor.u32 %v543, 2147483648
    %v546 = vmul.f32 %v544, 1.442695
    %v547 = vpow.pop %v546
    %v548 = vmul.f32 %v545, 1.442695
    %v549 = vpow.pop %v548
    %v550 = vadd.f32 %v547, 1.0
    %v551 = vadd.f32 %v549, 1.0
    %v552 = vrcp.pop %v550
    %v553 = vmul.f32 1.0, %v552
    %v554 = vrcp.pop %v551
    %v555 = vmul.f32 1.0, %v554
    %v556 = vtanh.pop %v542
    %v557 = vtanh.pop %v543
    %v558 = vmul.f32 %v553, %v391
    %v559 = vmul.f32 %v555, %v392
    %v562 = vrot.slane %v556, 1
    %v563 = vrot.slane %v557, 1
    %v566 = vmul.f32 %v553, %v562
    %v567 = vmul.f32 %v555, %v563
    %570 = vrot.lane.b32.xlu0 %v566, 64
    %v571 = vpop.permute.xlu0 %570
    %572 = vrot.lane.b32.xlu0 %v567, 64
    %v573 = vpop.permute.xlu0 %572
    %v576 = vadd.f32 %v558, %v571
    %v577 = vadd.f32 %v559, %v573
    %v578 = vtanh.pop %v576
    %v579 = vtanh.pop %v577
    %582 = vrot.lane.b32.xlu0 %v553, 64
    %v583 = vpop.permute.xlu0 %582
    %584 = vrot.lane.b32.xlu0 %v555, 64
    %v585 = vpop.permute.xlu0 %584
    %v586 = vrot.slane %v583, 1
    %v587 = vrot.slane %v585, 1
    %592 = vrot.lane.b32.xlu0 %v578, 64
    %v593 = vpop.permute.xlu0 %592
    %594 = vrot.lane.b32.xlu0 %v579, 64
    %v595 = vpop.permute.xlu0 %594
    %v598 = vmul.f32 %v586, %v593
    %v599 = vmul.f32 %v587, %v595
    %s600 = scalar_lea.vmem [#allocation2], 2
    %v601 = vld [vmem:[%s600] ss:$8 sm:$0x3]
    %s602 = scalar_lea.vmem [#allocation2], 18
    %v603 = vld [vmem:[%s602] ss:$8 sm:$0x3]
    %s604 = scalar_lea.vmem [#allocation3], 5
    %v605 = vld [vmem:[%s604] ss:$8 sm:$0x3]
    %s606 = scalar_lea.vmem [#allocation3], 21
    %v607 = vld [vmem:[%s606] ss:$8 sm:$0x3]
    %v608 = vadd.f32 %v601, %v605
    %v609 = vadd.f32 %v603, %v607
    %v612 = vcombine.low %v598, %v599
    %v614 = vunpack.c.l.s4 1966171168
    %v615 = vunpack.c.0.s8 %v614
    %v616 = vlaneseq
    %v617 = vshrl.u32 %v616, 7
    %v618 = vsub.s32 %v615, %v617
    %v619 = vrot.slane %v612, %v618
    %v621 = vunpack.c.l.s4 1966171168
    %v622 = vunpack.c.0.s8 %v621
    %v623 = vlaneseq
    %v624 = vshrl.u32 %v623, 7
    %v625 = vsub.s32 %v622, %v624
    %v626 = vrot.slane %v619, %v625
    %v627 = vsel %vm255, %v626, 0
    %629 = vmatprep.subr.mxu0 0.0
    %630 = vmatpush1.msra.mxu0 0.0
    %631 = vmatprep.subr.mxu0 0.0
    %632 = vmatpush1.msra.mxu0 0.0
    %633 = vmatprep.subr.mxu0 0.0
    %634 = vmatpush1.msra.mxu0 0.0
    %635 = vmatprep.subr.mxu0 0.0
    %636 = vmatpush1.msra.mxu0 0.0
    %637 = vmatprep.subr.mxu0 0.0
    %638 = vmatpush1.msra.mxu0 0.0
    %639 = vmatprep.subr.mxu0 0.0
    %640 = vmatpush1.msra.mxu0 0.0
    %641 = vmatprep.subr.mxu0 0.0
    %642 = vmatpush1.msra.mxu0 0.0
    %643 = vmatprep.subr.mxu0 0.0
    %644 = vmatpush1.msra.mxu0 0.0
    %645 = vmatprep.subr.mxu0 %v245
    %646 = vmatpush1.msra.mxu0 %v244
    %647 = vmatprep.subr.mxu0 %v243
    %648 = vmatpush1.msra.mxu0 %v242
    %649 = vmatprep.subr.mxu0 %v241
    %650 = vmatpush1.msra.mxu0 %v240
    %651 = vmatprep.subr.mxu0 %v239
    %652 = vmatpush1.msra.mxu0 %v238
    %653 = vmatprep.subr.mxu0 %v237
    %654 = vmatpush1.msra.mxu0 %v236
    %655 = vmatprep.subr.mxu0 %v235
    %656 = vmatpush1.msra.mxu0 %v234
    %657 = vmatprep.subr.mxu0 %v233
    %658 = vmatpush1.msra.mxu0 %v232
    %659 = vmatprep.subr.mxu0 %v231
    %660 = vmatpush1.msra.mxu0 %v230
    %661 = vmatprep.subr.mxu0 0.0
    %662 = vmatpush2.msra.mxu0 0.0
    %663 = vmatprep.subr.mxu0 0.0
    %664 = vmatpush2.msra.mxu0 0.0
    %665 = vmatprep.subr.mxu0 0.0
    %666 = vmatpush2.msra.mxu0 0.0
    %667 = vmatprep.subr.mxu0 0.0
    %668 = vmatpush2.msra.mxu0 0.0
    %669 = vmatprep.subr.mxu0 0.0
    %670 = vmatpush2.msra.mxu0 0.0
    %671 = vmatprep.subr.mxu0 0.0
    %672 = vmatpush2.msra.mxu0 0.0
    %673 = vmatprep.subr.mxu0 0.0
    %674 = vmatpush2.msra.mxu0 0.0
    %675 = vmatprep.subr.mxu0 0.0
    %676 = vmatpush2.msra.mxu0 0.0
    %677 = vmatprep.subr.mxu0 0.0
    %678 = vmatpush2.msra.mxu0 0.0
    %679 = vmatprep.subr.mxu0 0.0
    %680 = vmatpush2.msra.mxu0 0.0
    %681 = vmatprep.subr.mxu0 0.0
    %682 = vmatpush2.msra.mxu0 0.0
    %683 = vmatprep.subr.mxu0 0.0
    %684 = vmatpush2.msra.mxu0 0.0
    %685 = vmatprep.subr.mxu0 0.0
    %686 = vmatpush2.msra.mxu0 0.0
    %687 = vmatprep.subr.mxu0 0.0
    %688 = vmatpush2.msra.mxu0 0.0
    %689 = vmatprep.subr.mxu0 0.0
    %690 = vmatpush2.msra.mxu0 0.0
    %691 = vmatprep.subr.mxu0 0.0
    %692 = vmatpush2.msra.mxu0 0.0
    %693 = vmatprep.mubr.f32.mxu0 0.0
    %694 = vmatmul.mubr.f32.gmra.mxu0 %v627
    %v695 = vpop.f32.mrf.mxu0
    %v696 = vadd.f32 0.0, %v695
    %v697 = vpop.f32.mrf.mxu0
    %v698 = vadd.f32 0.0, %v697
    %699 = vdwg.mxu0
    %v702 = vcombine.low %v696, %v698
    %v704 = vunpack.c.l.s4 1966171168
    %v705 = vunpack.c.0.s8 %v704
    %v706 = vlaneseq
    %v707 = vshrl.u32 %v706, 7
    %v708 = vsub.s32 %v705, %v707
    %v709 = vrot.slane %v702, %v708
    %v710 = vcombine.high %v709, %v709
    %v712 = vunpack.c.l.s4 1966171168
    %v713 = vunpack.c.0.s8 %v712
    %v714 = vlaneseq
    %v715 = vshrl.u32 %v714, 7
    %v716 = vsub.s32 %v713, %v715
    %v717 = vrot.slane %v709, %v716
    %v719 = vunpack.c.l.s4 1966171168
    %v720 = vunpack.c.0.s8 %v719
    %v721 = vlaneseq
    %v722 = vshrl.u32 %v721, 7
    %v723 = vsub.s32 %v720, %v722
    %v724 = vrot.slane %v710, %v723
    %v727 = vadd.f32 %v608, %v717
    %v728 = vadd.f32 %v609, %v724
    %v729 = vxor.u32 %v727, 2147483648
    %v730 = vxor.u32 %v728, 2147483648
    %v731 = vmul.f32 %v729, 1.442695
    %v732 = vpow.pop %v731
    %v733 = vmul.f32 %v730, 1.442695
    %v734 = vpow.pop %v733
    %v735 = vadd.f32 %v732, 1.0
    %v736 = vadd.f32 %v734, 1.0
    %v737 = vrcp.pop %v735
    %v738 = vmul.f32 1.0, %v737
    %v739 = vrcp.pop %v736
    %v740 = vmul.f32 1.0, %v739
    %v741 = vtanh.pop %v727
    %v742 = vtanh.pop %v728
    %v743 = vmul.f32 %v738, %v576
    %v744 = vmul.f32 %v740, %v577
    %v747 = vrot.slane %v741, 1
    %v748 = vrot.slane %v742, 1
    %v751 = vmul.f32 %v738, %v747
    %v752 = vmul.f32 %v740, %v748
    %755 = vrot.lane.b32.xlu0 %v751, 64
    %v756 = vpop.permute.xlu0 %755
    %757 = vrot.lane.b32.xlu0 %v752, 64
    %v758 = vpop.permute.xlu0 %757
    %v761 = vadd.f32 %v743, %v756
    %v762 = vadd.f32 %v744, %v758
    %v763 = vtanh.pop %v761
    %v764 = vtanh.pop %v762
    %767 = vrot.lane.b32.xlu0 %v738, 64
    %v768 = vpop.permute.xlu0 %767
    %769 = vrot.lane.b32.xlu0 %v740, 64
    %v770 = vpop.permute.xlu0 %769
    %v771 = vrot.slane %v768, 1
    %v772 = vrot.slane %v770, 1
    %777 = vrot.lane.b32.xlu0 %v763, 64
    %v778 = vpop.permute.xlu0 %777
    %779 = vrot.lane.b32.xlu0 %v764, 64
    %v780 = vpop.permute.xlu0 %779
    %v783 = vmul.f32 %v771, %v778
    %v784 = vmul.f32 %v772, %v780
    %s785 = scalar_lea.vmem [#allocation2], 3
    %v786 = vld [vmem:[%s785] ss:$8 sm:$0x3]
    %s787 = scalar_lea.vmem [#allocation2], 19
    %v788 = vld [vmem:[%s787] ss:$8 sm:$0x3]
    %s789 = scalar_lea.vmem [#allocation3], 4
    %v790 = vld [vmem:[%s789] ss:$8 sm:$0x3]
    %s791 = scalar_lea.vmem [#allocation3], 20
    %v792 = vld [vmem:[%s791] ss:$8 sm:$0x3]
    %v793 = vadd.f32 %v786, %v790
    %v794 = vadd.f32 %v788, %v792
    %v797 = vcombine.low %v783, %v784
    %v799 = vunpack.c.l.s4 1966171168
    %v800 = vunpack.c.0.s8 %v799
    %v801 = vlaneseq
    %v802 = vshrl.u32 %v801, 7
    %v803 = vsub.s32 %v800, %v802
    %v804 = vrot.slane %v797, %v803
    %v806 = vunpack.c.l.s4 1966171168
    %v807 = vunpack.c.0.s8 %v806
    %v808 = vlaneseq
    %v809 = vshrl.u32 %v808, 7
    %v810 = vsub.s32 %v807, %v809
    %v811 = vrot.slane %v804, %v810
    %v812 = vsel %vm255, %v811, 0
    %814 = vmatprep.subr.mxu0 0.0
    %815 = vmatpush1.msra.mxu0 0.0
    %816 = vmatprep.subr.mxu0 0.0
    %817 = vmatpush1.msra.mxu0 0.0
    %818 = vmatprep.subr.mxu0 0.0
    %819 = vmatpush1.msra.mxu0 0.0
    %820 = vmatprep.subr.mxu0 0.0
    %821 = vmatpush1.msra.mxu0 0.0
    %822 = vmatprep.subr.mxu0 0.0
    %823 = vmatpush1.msra.mxu0 0.0
    %824 = vmatprep.subr.mxu0 0.0
    %825 = vmatpush1.msra.mxu0 0.0
    %826 = vmatprep.subr.mxu0 0.0
    %827 = vmatpush1.msra.mxu0 0.0
    %828 = vmatprep.subr.mxu0 0.0
    %829 = vmatpush1.msra.mxu0 0.0
    %830 = vmatprep.subr.mxu0 %v245
    %831 = vmatpush1.msra.mxu0 %v244
    %832 = vmatprep.subr.mxu0 %v243
    %833 = vmatpush1.msra.mxu0 %v242
    %834 = vmatprep.subr.mxu0 %v241
    %835 = vmatpush1.msra.mxu0 %v240
    %836 = vmatprep.subr.mxu0 %v239
    %837 = vmatpush1.msra.mxu0 %v238
    %838 = vmatprep.subr.mxu0 %v237
    %839 = vmatpush1.msra.mxu0 %v236
    %840 = vmatprep.subr.mxu0 %v235
    %841 = vmatpush1.msra.mxu0 %v234
    %842 = vmatprep.subr.mxu0 %v233
    %843 = vmatpush1.msra.mxu0 %v232
    %844 = vmatprep.subr.mxu0 %v231
    %845 = vmatpush1.msra.mxu0 %v230
    %846 = vmatprep.subr.mxu0 0.0
    %847 = vmatpush2.msra.mxu0 0.0
    %848 = vmatprep.subr.mxu0 0.0
    %849 = vmatpush2.msra.mxu0 0.0
    %850 = vmatprep.subr.mxu0 0.0
    %851 = vmatpush2.msra.mxu0 0.0
    %852 = vmatprep.subr.mxu0 0.0
    %853 = vmatpush2.msra.mxu0 0.0
    %854 = vmatprep.subr.mxu0 0.0
    %855 = vmatpush2.msra.mxu0 0.0
    %856 = vmatprep.subr.mxu0 0.0
    %857 = vmatpush2.msra.mxu0 0.0
    %858 = vmatprep.subr.mxu0 0.0
    %859 = vmatpush2.msra.mxu0 0.0
    %860 = vmatprep.subr.mxu0 0.0
    %861 = vmatpush2.msra.mxu0 0.0
    %862 = vmatprep.subr.mxu0 0.0
    %863 = vmatpush2.msra.mxu0 0.0
    %864 = vmatprep.subr.mxu0 0.0
    %865 = vmatpush2.msra.mxu0 0.0
    %866 = vmatprep.subr.mxu0 0.0
    %867 = vmatpush2.msra.mxu0 0.0
    %868 = vmatprep.subr.mxu0 0.0
    %869 = vmatpush2.msra.mxu0 0.0
    %870 = vmatprep.subr.mxu0 0.0
    %871 = vmatpush2.msra.mxu0 0.0
    %872 = vmatprep.subr.mxu0 0.0
    %873 = vmatpush2.msra.mxu0 0.0
    %874 = vmatprep.subr.mxu0 0.0
    %875 = vmatpush2.msra.mxu0 0.0
    %876 = vmatprep.subr.mxu0 0.0
    %877 = vmatpush2.msra.mxu0 0.0
    %878 = vmatprep.mubr.f32.mxu0 0.0
    %879 = vmatmul.mubr.f32.gmra.mxu0 %v812
    %v880 = vpop.f32.mrf.mxu0
    %v881 = vadd.f32 0.0, %v880
    %v882 = vpop.f32.mrf.mxu0
    %v883 = vadd.f32 0.0, %v882
    %884 = vdwg.mxu0
    %v887 = vcombine.low %v881, %v883
    %v889 = vunpack.c.l.s4 1966171168
    %v890 = vunpack.c.0.s8 %v889
    %v891 = vlaneseq
    %v892 = vshrl.u32 %v891, 7
    %v893 = vsub.s32 %v890, %v892
    %v894 = vrot.slane %v887, %v893
    %v895 = vcombine.high %v894, %v894
    %v897 = vunpack.c.l.s4 1966171168
    %v898 = vunpack.c.0.s8 %v897
    %v899 = vlaneseq
    %v900 = vshrl.u32 %v899, 7
    %v901 = vsub.s32 %v898, %v900
    %v902 = vrot.slane %v894, %v901
    %v904 = vunpack.c.l.s4 1966171168
    %v905 = vunpack.c.0.s8 %v904
    %v906 = vlaneseq
    %v907 = vshrl.u32 %v906, 7
    %v908 = vsub.s32 %v905, %v907
    %v909 = vrot.slane %v895, %v908
    %v912 = vadd.f32 %v793, %v902
    %v913 = vadd.f32 %v794, %v909
    %v914 = vxor.u32 %v912, 2147483648
    %v915 = vxor.u32 %v913, 2147483648
    %v916 = vmul.f32 %v914, 1.442695
    %v917 = vpow.pop %v916
    %v918 = vmul.f32 %v915, 1.442695
    %v919 = vpow.pop %v918
    %v920 = vadd.f32 %v917, 1.0
    %v921 = vadd.f32 %v919, 1.0
    %v922 = vrcp.pop %v920
    %v923 = vmul.f32 1.0, %v922
    %v924 = vrcp.pop %v921
    %v925 = vmul.f32 1.0, %v924
    %v926 = vtanh.pop %v912
    %v927 = vtanh.pop %v913
    %v928 = vmul.f32 %v923, %v761
    %v929 = vmul.f32 %v925, %v762
    %v932 = vrot.slane %v926, 1
    %v933 = vrot.slane %v927, 1
    %v936 = vmul.f32 %v923, %v932
    %v937 = vmul.f32 %v925, %v933
    %940 = vrot.lane.b32.xlu0 %v936, 64
    %v941 = vpop.permute.xlu0 %940
    %942 = vrot.lane.b32.xlu0 %v937, 64
    %v943 = vpop.permute.xlu0 %942
    %v946 = vadd.f32 %v928, %v941
    %v947 = vadd.f32 %v929, %v943
    %v948 = vtanh.pop %v946
    %v949 = vtanh.pop %v947
    %952 = vrot.lane.b32.xlu0 %v923, 64
    %v953 = vpop.permute.xlu0 %952
    %954 = vrot.lane.b32.xlu0 %v925, 64
    %v955 = vpop.permute.xlu0 %954
    %v956 = vrot.slane %v953, 1
    %v957 = vrot.slane %v955, 1
    %962 = vrot.lane.b32.xlu0 %v948, 64
    %v963 = vpop.permute.xlu0 %962
    %964 = vrot.lane.b32.xlu0 %v949, 64
    %v965 = vpop.permute.xlu0 %964
    %v968 = vmul.f32 %v956, %v963
    %v969 = vmul.f32 %v957, %v965
    %s970 = scalar_lea.vmem [#allocation2], 4
    %v971 = vld [vmem:[%s970] ss:$8 sm:$0x3]
    %s972 = scalar_lea.vmem [#allocation2], 20
    %v973 = vld [vmem:[%s972] ss:$8 sm:$0x3]
    %s974 = scalar_lea.vmem [#allocation3], 3
    %v975 = vld [vmem:[%s974] ss:$8 sm:$0x3]
    %s976 = scalar_lea.vmem [#allocation3], 19
    %v977 = vld [vmem:[%s976] ss:$8 sm:$0x3]
    %v978 = vadd.f32 %v971, %v975
    %v979 = vadd.f32 %v973, %v977
    %v982 = vcombine.low %v968, %v969
    %v984 = vunpack.c.l.s4 1966171168
    %v985 = vunpack.c.0.s8 %v984
    %v986 = vlaneseq
    %v987 = vshrl.u32 %v986, 7
    %v988 = vsub.s32 %v985, %v987
    %v989 = vrot.slane %v982, %v988
    %v991 = vunpack.c.l.s4 1966171168
    %v992 = vunpack.c.0.s8 %v991
    %v993 = vlaneseq
    %v994 = vshrl.u32 %v993, 7
    %v995 = vsub.s32 %v992, %v994
    %v996 = vrot.slane %v989, %v995
    %v997 = vsel %vm255, %v996, 0
    %999 = vmatprep.subr.mxu0 0.0
    %1000 = vmatpush1.msra.mxu0 0.0
    %1001 = vmatprep.subr.mxu0 0.0
    %1002 = vmatpush1.msra.mxu0 0.0
    %1003 = vmatprep.subr.mxu0 0.0
    %1004 = vmatpush1.msra.mxu0 0.0
    %1005 = vmatprep.subr.mxu0 0.0
    %1006 = vmatpush1.msra.mxu0 0.0
    %1007 = vmatprep.subr.mxu0 0.0
    %1008 = vmatpush1.msra.mxu0 0.0
    %1009 = vmatprep.subr.mxu0 0.0
    %1010 = vmatpush1.msra.mxu0 0.0
    %1011 = vmatprep.subr.mxu0 0.0
    %1012 = vmatpush1.msra.mxu0 0.0
    %1013 = vmatprep.subr.mxu0 0.0
    %1014 = vmatpush1.msra.mxu0 0.0
    %1015 = vmatprep.subr.mxu0 %v245
    %1016 = vmatpush1.msra.mxu0 %v244
    %1017 = vmatprep.subr.mxu0 %v243
    %1018 = vmatpush1.msra.mxu0 %v242
    %1019 = vmatprep.subr.mxu0 %v241
    %1020 = vmatpush1.msra.mxu0 %v240
    %1021 = vmatprep.subr.mxu0 %v239
    %1022 = vmatpush1.msra.mxu0 %v238
    %1023 = vmatprep.subr.mxu0 %v237
    %1024 = vmatpush1.msra.mxu0 %v236
    %1025 = vmatprep.subr.mxu0 %v235
    %1026 = vmatpush1.msra.mxu0 %v234
    %1027 = vmatprep.subr.mxu0 %v233
    %1028 = vmatpush1.msra.mxu0 %v232
    %1029 = vmatprep.subr.mxu0 %v231
    %1030 = vmatpush1.msra.mxu0 %v230
    %1031 = vmatprep.subr.mxu0 0.0
    %1032 = vmatpush2.msra.mxu0 0.0
    %1033 = vmatprep.subr.mxu0 0.0
    %1034 = vmatpush2.msra.mxu0 0.0
    %1035 = vmatprep.subr.mxu0 0.0
    %1036 = vmatpush2.msra.mxu0 0.0
    %1037 = vmatprep.subr.mxu0 0.0
    %1038 = vmatpush2.msra.mxu0 0.0
    %1039 = vmatprep.subr.mxu0 0.0
    %1040 = vmatpush2.msra.mxu0 0.0
    %1041 = vmatprep.subr.mxu0 0.0
    %1042 = vmatpush2.msra.mxu0 0.0
    %1043 = vmatprep.subr.mxu0 0.0
    %1044 = vmatpush2.msra.mxu0 0.0
    %1045 = vmatprep.subr.mxu0 0.0
    %1046 = vmatpush2.msra.mxu0 0.0
    %1047 = vmatprep.subr.mxu0 0.0
    %1048 = vmatpush2.msra.mxu0 0.0
    %1049 = vmatprep.subr.mxu0 0.0
    %1050 = vmatpush2.msra.mxu0 0.0
    %1051 = vmatprep.subr.mxu0 0.0
    %1052 = vmatpush2.msra.mxu0 0.0
    %1053 = vmatprep.subr.mxu0 0.0
    %1054 = vmatpush2.msra.mxu0 0.0
    %1055 = vmatprep.subr.mxu0 0.0
    %1056 = vmatpush2.msra.mxu0 0.0
    %1057 = vmatprep.subr.mxu0 0.0
    %1058 = vmatpush2.msra.mxu0 0.0
    %1059 = vmatprep.subr.mxu0 0.0
    %1060 = vmatpush2.msra.mxu0 0.0
    %1061 = vmatprep.subr.mxu0 0.0
    %1062 = vmatpush2.msra.mxu0 0.0
    %1063 = vmatprep.mubr.f32.mxu0 0.0
    %1064 = vmatmul.mubr.f32.gmra.mxu0 %v997
    %v1065 = vpop.f32.mrf.mxu0
    %v1066 = vadd.f32 0.0, %v1065
    %v1067 = vpop.f32.mrf.mxu0
    %v1068 = vadd.f32 0.0, %v1067
    %1069 = vdwg.mxu0
    %v1072 = vcombine.low %v1066, %v1068
    %v1074 = vunpack.c.l.s4 1966171168
    %v1075 = vunpack.c.0.s8 %v1074
    %v1076 = vlaneseq
    %v1077 = vshrl.u32 %v1076, 7
    %v1078 = vsub.s32 %v1075, %v1077
    %v1079 = vrot.slane %v1072, %v1078
    %v1080 = vcombine.high %v1079, %v1079
    %v1082 = vunpack.c.l.s4 1966171168
    %v1083 = vunpack.c.0.s8 %v1082
    %v1084 = vlaneseq
    %v1085 = vshrl.u32 %v1084, 7
    %v1086 = vsub.s32 %v1083, %v1085
    %v1087 = vrot.slane %v1079, %v1086
    %v1089 = vunpack.c.l.s4 1966171168
    %v1090 = vunpack.c.0.s8 %v1089
    %v1091 = vlaneseq
    %v1092 = vshrl.u32 %v1091, 7
    %v1093 = vsub.s32 %v1090, %v1092
    %v1094 = vrot.slane %v1080, %v1093
    %v1097 = vadd.f32 %v978, %v1087
    %v1098 = vadd.f32 %v979, %v1094
    %v1099 = vxor.u32 %v1097, 2147483648
    %v1100 = vxor.u32 %v1098, 2147483648
    %v1101 = vmul.f32 %v1099, 1.442695
    %v1102 = vpow.pop %v1101
    %v1103 = vmul.f32 %v1100, 1.442695
    %v1104 = vpow.pop %v1103
    %v1105 = vadd.f32 %v1102, 1.0
    %v1106 = vadd.f32 %v1104, 1.0
    %v1107 = vrcp.pop %v1105
    %v1108 = vmul.f32 1.0, %v1107
    %v1109 = vrcp.pop %v1106
    %v1110 = vmul.f32 1.0, %v1109
    %v1111 = vtanh.pop %v1097
    %v1112 = vtanh.pop %v1098
    %v1113 = vmul.f32 %v1108, %v946
    %v1114 = vmul.f32 %v1110, %v947
    %v1117 = vrot.slane %v1111, 1
    %v1118 = vrot.slane %v1112, 1
    %v1121 = vmul.f32 %v1108, %v1117
    %v1122 = vmul.f32 %v1110, %v1118
    %1125 = vrot.lane.b32.xlu0 %v1121, 64
    %v1126 = vpop.permute.xlu0 %1125
    %1127 = vrot.lane.b32.xlu0 %v1122, 64
    %v1128 = vpop.permute.xlu0 %1127
    %v1131 = vadd.f32 %v1113, %v1126
    %v1132 = vadd.f32 %v1114, %v1128
    %v1133 = vtanh.pop %v1131
    %v1134 = vtanh.pop %v1132
    %1137 = vrot.lane.b32.xlu0 %v1108, 64
    %v1138 = vpop.permute.xlu0 %1137
    %1139 = vrot.lane.b32.xlu0 %v1110, 64
    %v1140 = vpop.permute.xlu0 %1139
    %v1141 = vrot.slane %v1138, 1
    %v1142 = vrot.slane %v1140, 1
    %1147 = vrot.lane.b32.xlu0 %v1133, 64
    %v1148 = vpop.permute.xlu0 %1147
    %1149 = vrot.lane.b32.xlu0 %v1134, 64
    %v1150 = vpop.permute.xlu0 %1149
    %v1153 = vmul.f32 %v1141, %v1148
    %v1154 = vmul.f32 %v1142, %v1150
    %s1155 = scalar_lea.vmem [#allocation2], 5
    %v1156 = vld [vmem:[%s1155] ss:$8 sm:$0x3]
    %s1157 = scalar_lea.vmem [#allocation2], 21
    %v1158 = vld [vmem:[%s1157] ss:$8 sm:$0x3]
    %s1159 = scalar_lea.vmem [#allocation3], 2
    %v1160 = vld [vmem:[%s1159] ss:$8 sm:$0x3]
    %s1161 = scalar_lea.vmem [#allocation3], 18
    %v1162 = vld [vmem:[%s1161] ss:$8 sm:$0x3]
    %v1163 = vadd.f32 %v1156, %v1160
    %v1164 = vadd.f32 %v1158, %v1162
    %v1167 = vcombine.low %v1153, %v1154
    %v1169 = vunpack.c.l.s4 1966171168
    %v1170 = vunpack.c.0.s8 %v1169
    %v1171 = vlaneseq
    %v1172 = vshrl.u32 %v1171, 7
    %v1173 = vsub.s32 %v1170, %v1172
    %v1174 = vrot.slane %v1167, %v1173
    %v1176 = vunpack.c.l.s4 1966171168
    %v1177 = vunpack.c.0.s8 %v1176
    %v1178 = vlaneseq
    %v1179 = vshrl.u32 %v1178, 7
    %v1180 = vsub.s32 %v1177, %v1179
    %v1181 = vrot.slane %v1174, %v1180
    %v1182 = vsel %vm255, %v1181, 0
    %1184 = vmatprep.subr.mxu0 0.0
    %1185 = vmatpush1.msra.mxu0 0.0
    %1186 = vmatprep.subr.mxu0 0.0
    %1187 = vmatpush1.msra.mxu0 0.0
    %1188 = vmatprep.subr.mxu0 0.0
    %1189 = vmatpush1.msra.mxu0 0.0
    %1190 = vmatprep.subr.mxu0 0.0
    %1191 = vmatpush1.msra.mxu0 0.0
    %1192 = vmatprep.subr.mxu0 0.0
    %1193 = vmatpush1.msra.mxu0 0.0
    %1194 = vmatprep.subr.mxu0 0.0
    %1195 = vmatpush1.msra.mxu0 0.0
    %1196 = vmatprep.subr.mxu0 0.0
    %1197 = vmatpush1.msra.mxu0 0.0
    %1198 = vmatprep.subr.mxu0 0.0
    %1199 = vmatpush1.msra.mxu0 0.0
    %1200 = vmatprep.subr.mxu0 %v245
    %1201 = vmatpush1.msra.mxu0 %v244
    %1202 = vmatprep.subr.mxu0 %v243
    %1203 = vmatpush1.msra.mxu0 %v242
    %1204 = vmatprep.subr.mxu0 %v241
    %1205 = vmatpush1.msra.mxu0 %v240
    %1206 = vmatprep.subr.mxu0 %v239
    %1207 = vmatpush1.msra.mxu0 %v238
    %1208 = vmatprep.subr.mxu0 %v237
    %1209 = vmatpush1.msra.mxu0 %v236
    %1210 = vmatprep.subr.mxu0 %v235
    %1211 = vmatpush1.msra.mxu0 %v234
    %1212 = vmatprep.subr.mxu0 %v233
    %1213 = vmatpush1.msra.mxu0 %v232
    %1214 = vmatprep.subr.mxu0 %v231
    %1215 = vmatpush1.msra.mxu0 %v230
    %1216 = vmatprep.subr.mxu0 0.0
    %1217 = vmatpush2.msra.mxu0 0.0
    %1218 = vmatprep.subr.mxu0 0.0
    %1219 = vmatpush2.msra.mxu0 0.0
    %1220 = vmatprep.subr.mxu0 0.0
    %1221 = vmatpush2.msra.mxu0 0.0
    %1222 = vmatprep.subr.mxu0 0.0
    %1223 = vmatpush2.msra.mxu0 0.0
    %1224 = vmatprep.subr.mxu0 0.0
    %1225 = vmatpush2.msra.mxu0 0.0
    %1226 = vmatprep.subr.mxu0 0.0
    %1227 = vmatpush2.msra.mxu0 0.0
    %1228 = vmatprep.subr.mxu0 0.0
    %1229 = vmatpush2.msra.mxu0 0.0
    %1230 = vmatprep.subr.mxu0 0.0
    %1231 = vmatpush2.msra.mxu0 0.0
    %1232 = vmatprep.subr.mxu0 0.0
    %1233 = vmatpush2.msra.mxu0 0.0
    %1234 = vmatprep.subr.mxu0 0.0
    %1235 = vmatpush2.msra.mxu0 0.0
    %1236 = vmatprep.subr.mxu0 0.0
    %1237 = vmatpush2.msra.mxu0 0.0
    %1238 = vmatprep.subr.mxu0 0.0
    %1239 = vmatpush2.msra.mxu0 0.0
    %1240 = vmatprep.subr.mxu0 0.0
    %1241 = vmatpush2.msra.mxu0 0.0
    %1242 = vmatprep.subr.mxu0 0.0
    %1243 = vmatpush2.msra.mxu0 0.0
    %1244 = vmatprep.subr.mxu0 0.0
    %1245 = vmatpush2.msra.mxu0 0.0
    %1246 = vmatprep.subr.mxu0 0.0
    %1247 = vmatpush2.msra.mxu0 0.0
    %1248 = vmatprep.mubr.f32.mxu0 0.0
    %1249 = vmatmul.mubr.f32.gmra.mxu0 %v1182
    %v1250 = vpop.f32.mrf.mxu0
    %v1251 = vadd.f32 0.0, %v1250
    %v1252 = vpop.f32.mrf.mxu0
    %v1253 = vadd.f32 0.0, %v1252
    %1254 = vdwg.mxu0
    %v1257 = vcombine.low %v1251, %v1253
    %v1259 = vunpack.c.l.s4 1966171168
    %v1260 = vunpack.c.0.s8 %v1259
    %v1261 = vlaneseq
    %v1262 = vshrl.u32 %v1261, 7
    %v1263 = vsub.s32 %v1260, %v1262
    %v1264 = vrot.slane %v1257, %v1263
    %v1265 = vcombine.high %v1264, %v1264
    %v1267 = vunpack.c.l.s4 1966171168
    %v1268 = vunpack.c.0.s8 %v1267
    %v1269 = vlaneseq
    %v1270 = vshrl.u32 %v1269, 7
    %v1271 = vsub.s32 %v1268, %v1270
    %v1272 = vrot.slane %v1264, %v1271
    %v1274 = vunpack.c.l.s4 1966171168
    %v1275 = vunpack.c.0.s8 %v1274
    %v1276 = vlaneseq
    %v1277 = vshrl.u32 %v1276, 7
    %v1278 = vsub.s32 %v1275, %v1277
    %v1279 = vrot.slane %v1265, %v1278
    %v1282 = vadd.f32 %v1163, %v1272
    %v1283 = vadd.f32 %v1164, %v1279
    %v1284 = vxor.u32 %v1282, 2147483648
    %v1285 = vxor.u32 %v1283, 2147483648
    %v1286 = vmul.f32 %v1284, 1.442695
    %v1287 = vpow.pop %v1286
    %v1288 = vmul.f32 %v1285, 1.442695
    %v1289 = vpow.pop %v1288
    %v1290 = vadd.f32 %v1287, 1.0
    %v1291 = vadd.f32 %v1289, 1.0
    %v1292 = vrcp.pop %v1290
    %v1293 = vmul.f32 1.0, %v1292
    %v1294 = vrcp.pop %v1291
    %v1295 = vmul.f32 1.0, %v1294
    %v1296 = vtanh.pop %v1282
    %v1297 = vtanh.pop %v1283
    %v1298 = vmul.f32 %v1293, %v1131
    %v1299 = vmul.f32 %v1295, %v1132
    %v1302 = vrot.slane %v1296, 1
    %v1303 = vrot.slane %v1297, 1
    %v1306 = vmul.f32 %v1293, %v1302
    %v1307 = vmul.f32 %v1295, %v1303
    %1310 = vrot.lane.b32.xlu0 %v1306, 64
    %v1311 = vpop.permute.xlu0 %1310
    %1312 = vrot.lane.b32.xlu0 %v1307, 64
    %v1313 = vpop.permute.xlu0 %1312
    %v1316 = vadd.f32 %v1298, %v1311
    %v1317 = vadd.f32 %v1299, %v1313
    %v1318 = vtanh.pop %v1316
    %v1319 = vtanh.pop %v1317
    %1322 = vrot.lane.b32.xlu0 %v1293, 64
    %v1323 = vpop.permute.xlu0 %1322
    %1324 = vrot.lane.b32.xlu0 %v1295, 64
    %v1325 = vpop.permute.xlu0 %1324
    %v1326 = vrot.slane %v1323, 1
    %v1327 = vrot.slane %v1325, 1
    %1332 = vrot.lane.b32.xlu0 %v1318, 64
    %v1333 = vpop.permute.xlu0 %1332
    %1334 = vrot.lane.b32.xlu0 %v1319, 64
    %v1335 = vpop.permute.xlu0 %1334
    %v1338 = vmul.f32 %v1326, %v1333
    %v1339 = vmul.f32 %v1327, %v1335
    %s1340 = scalar_lea.vmem [#allocation2], 6
    %v1341 = vld [vmem:[%s1340] ss:$8 sm:$0x3]
    %s1342 = scalar_lea.vmem [#allocation2], 22
    %v1343 = vld [vmem:[%s1342] ss:$8 sm:$0x3]
    %s1344 = scalar_lea.vmem [#allocation3], 1
    %v1345 = vld [vmem:[%s1344] ss:$8 sm:$0x3]
    %s1346 = scalar_lea.vmem [#allocation3], 17
    %v1347 = vld [vmem:[%s1346] ss:$8 sm:$0x3]
    %v1348 = vadd.f32 %v1341, %v1345
    %v1349 = vadd.f32 %v1343, %v1347
    %v1352 = vcombine.low %v1338, %v1339
    %v1354 = vunpack.c.l.s4 1966171168
    %v1355 = vunpack.c.0.s8 %v1354
    %v1356 = vlaneseq
    %v1357 = vshrl.u32 %v1356, 7
    %v1358 = vsub.s32 %v1355, %v1357
    %v1359 = vrot.slane %v1352, %v1358
    %v1361 = vunpack.c.l.s4 1966171168
    %v1362 = vunpack.c.0.s8 %v1361
    %v1363 = vlaneseq
    %v1364 = vshrl.u32 %v1363, 7
    %v1365 = vsub.s32 %v1362, %v1364
    %v1366 = vrot.slane %v1359, %v1365
    %v1367 = vsel %vm255, %v1366, 0
    %1369 = vmatprep.subr.mxu0 0.0
    %1370 = vmatpush1.msra.mxu0 0.0
    %1371 = vmatprep.subr.mxu0 0.0
    %1372 = vmatpush1.msra.mxu0 0.0
    %1373 = vmatprep.subr.mxu0 0.0
    %1374 = vmatpush1.msra.mxu0 0.0
    %1375 = vmatprep.subr.mxu0 0.0
    %1376 = vmatpush1.msra.mxu0 0.0
    %1377 = vmatprep.subr.mxu0 0.0
    %1378 = vmatpush1.msra.mxu0 0.0
    %1379 = vmatprep.subr.mxu0 0.0
    %1380 = vmatpush1.msra.mxu0 0.0
    %1381 = vmatprep.subr.mxu0 0.0
    %1382 = vmatpush1.msra.mxu0 0.0
    %1383 = vmatprep.subr.mxu0 0.0
    %1384 = vmatpush1.msra.mxu0 0.0
    %1385 = vmatprep.subr.mxu0 %v245
    %1386 = vmatpush1.msra.mxu0 %v244
    %1387 = vmatprep.subr.mxu0 %v243
    %1388 = vmatpush1.msra.mxu0 %v242
    %1389 = vmatprep.subr.mxu0 %v241
    %1390 = vmatpush1.msra.mxu0 %v240
    %1391 = vmatprep.subr.mxu0 %v239
    %1392 = vmatpush1.msra.mxu0 %v238
    %1393 = vmatprep.subr.mxu0 %v237
    %1394 = vmatpush1.msra.mxu0 %v236
    %1395 = vmatprep.subr.mxu0 %v235
    %1396 = vmatpush1.msra.mxu0 %v234
    %1397 = vmatprep.subr.mxu0 %v233
    %1398 = vmatpush1.msra.mxu0 %v232
    %1399 = vmatprep.subr.mxu0 %v231
    %1400 = vmatpush1.msra.mxu0 %v230
    %1401 = vmatprep.subr.mxu0 0.0
    %1402 = vmatpush2.msra.mxu0 0.0
    %1403 = vmatprep.subr.mxu0 0.0
    %1404 = vmatpush2.msra.mxu0 0.0
    %1405 = vmatprep.subr.mxu0 0.0
    %1406 = vmatpush2.msra.mxu0 0.0
    %1407 = vmatprep.subr.mxu0 0.0
    %1408 = vmatpush2.msra.mxu0 0.0
    %1409 = vmatprep.subr.mxu0 0.0
    %1410 = vmatpush2.msra.mxu0 0.0
    %1411 = vmatprep.subr.mxu0 0.0
    %1412 = vmatpush2.msra.mxu0 0.0
    %1413 = vmatprep.subr.mxu0 0.0
    %1414 = vmatpush2.msra.mxu0 0.0
    %1415 = vmatprep.subr.mxu0 0.0
    %1416 = vmatpush2.msra.mxu0 0.0
    %1417 = vmatprep.subr.mxu0 0.0
    %1418 = vmatpush2.msra.mxu0 0.0
    %1419 = vmatprep.subr.mxu0 0.0
    %1420 = vmatpush2.msra.mxu0 0.0
    %1421 = vmatprep.subr.mxu0 0.0
    %1422 = vmatpush2.msra.mxu0 0.0
    %1423 = vmatprep.subr.mxu0 0.0
    %1424 = vmatpush2.msra.mxu0 0.0
    %1425 = vmatprep.subr.mxu0 0.0
    %1426 = vmatpush2.msra.mxu0 0.0
    %1427 = vmatprep.subr.mxu0 0.0
    %1428 = vmatpush2.msra.mxu0 0.0
    %1429 = vmatprep.subr.mxu0 0.0
    %1430 = vmatpush2.msra.mxu0 0.0
    %1431 = vmatprep.subr.mxu0 0.0
    %1432 = vmatpush2.msra.mxu0 0.0
    %1433 = vmatprep.mubr.f32.mxu0 0.0
    %1434 = vmatmul.mubr.f32.gmra.mxu0 %v1367
    %v1435 = vpop.f32.mrf.mxu0
    %v1436 = vadd.f32 0.0, %v1435
    %v1437 = vpop.f32.mrf.mxu0
    %v1438 = vadd.f32 0.0, %v1437
    %1439 = vdwg.mxu0
    %v1442 = vcombine.low %v1436, %v1438
    %v1444 = vunpack.c.l.s4 1966171168
    %v1445 = vunpack.c.0.s8 %v1444
    %v1446 = vlaneseq
    %v1447 = vshrl.u32 %v1446, 7
    %v1448 = vsub.s32 %v1445, %v1447
    %v1449 = vrot.slane %v1442, %v1448
    %v1450 = vcombine.high %v1449, %v1449
    %v1452 = vunpack.c.l.s4 1966171168
    %v1453 = vunpack.c.0.s8 %v1452
    %v1454 = vlaneseq
    %v1455 = vshrl.u32 %v1454, 7
    %v1456 = vsub.s32 %v1453, %v1455
    %v1457 = vrot.slane %v1449, %v1456
    %v1459 = vunpack.c.l.s4 1966171168
    %v1460 = vunpack.c.0.s8 %v1459
    %v1461 = vlaneseq
    %v1462 = vshrl.u32 %v1461, 7
    %v1463 = vsub.s32 %v1460, %v1462
    %v1464 = vrot.slane %v1450, %v1463
    %v1467 = vadd.f32 %v1348, %v1457
    %v1468 = vadd.f32 %v1349, %v1464
    %v1469 = vxor.u32 %v1467, 2147483648
    %v1470 = vxor.u32 %v1468, 2147483648
    %v1471 = vmul.f32 %v1469, 1.442695
    %v1472 = vpow.pop %v1471
    %v1473 = vmul.f32 %v1470, 1.442695
    %v1474 = vpow.pop %v1473
    %v1475 = vadd.f32 %v1472, 1.0
    %v1476 = vadd.f32 %v1474, 1.0
    %v1477 = vrcp.pop %v1475
    %v1478 = vmul.f32 1.0, %v1477
    %v1479 = vrcp.pop %v1476
    %v1480 = vmul.f32 1.0, %v1479
    %v1481 = vtanh.pop %v1467
    %v1482 = vtanh.pop %v1468
    %v1483 = vmul.f32 %v1478, %v1316
    %v1484 = vmul.f32 %v1480, %v1317
    %v1487 = vrot.slane %v1481, 1
    %v1488 = vrot.slane %v1482, 1
    %v1491 = vmul.f32 %v1478, %v1487
    %v1492 = vmul.f32 %v1480, %v1488
    %1495 = vrot.lane.b32.xlu0 %v1491, 64
    %v1496 = vpop.permute.xlu0 %1495
    %1497 = vrot.lane.b32.xlu0 %v1492, 64
    %v1498 = vpop.permute.xlu0 %1497
    %v1501 = vadd.f32 %v1483, %v1496
    %v1502 = vadd.f32 %v1484, %v1498
    %v1503 = vtanh.pop %v1501
    %v1504 = vtanh.pop %v1502
    %1507 = vrot.lane.b32.xlu0 %v1478, 64
    %v1508 = vpop.permute.xlu0 %1507
    %1509 = vrot.lane.b32.xlu0 %v1480, 64
    %v1510 = vpop.permute.xlu0 %1509
    %v1511 = vrot.slane %v1508, 1
    %v1512 = vrot.slane %v1510, 1
    %1517 = vrot.lane.b32.xlu0 %v1503, 64
    %v1518 = vpop.permute.xlu0 %1517
    %1519 = vrot.lane.b32.xlu0 %v1504, 64
    %v1520 = vpop.permute.xlu0 %1519
    %v1523 = vmul.f32 %v1511, %v1518
    %v1524 = vmul.f32 %v1512, %v1520
    %s1525 = scalar_lea.vmem [#allocation2], 7
    %v1526 = vld [vmem:[%s1525] ss:$8 sm:$0x3]
    %s1527 = scalar_lea.vmem [#allocation2], 23
    %v1528 = vld [vmem:[%s1527] ss:$8 sm:$0x3]
    %v1529 = vld [vmem:[#allocation3] ss:$8 sm:$0x3]
    %s1530 = scalar_lea.vmem [#allocation3], 16
    %v1531 = vld [vmem:[%s1530] ss:$8 sm:$0x3]
    %v1532 = vadd.f32 %v1526, %v1529
    %v1533 = vadd.f32 %v1528, %v1531
    %v1536 = vcombine.low %v1523, %v1524
    %v1538 = vunpack.c.l.s4 1966171168
    %v1539 = vunpack.c.0.s8 %v1538
    %v1540 = vlaneseq
    %v1541 = vshrl.u32 %v1540, 7
    %v1542 = vsub.s32 %v1539, %v1541
    %v1543 = vrot.slane %v1536, %v1542
    %v1545 = vunpack.c.l.s4 1966171168
    %v1546 = vunpack.c.0.s8 %v1545
    %v1547 = vlaneseq
    %v1548 = vshrl.u32 %v1547, 7
    %v1549 = vsub.s32 %v1546, %v1548
    %v1550 = vrot.slane %v1543, %v1549
    %v1551 = vsel %vm255, %v1550, 0
    %1553 = vmatprep.subr.mxu0 0.0
    %1554 = vmatpush1.msra.mxu0 0.0
    %1555 = vmatprep.subr.mxu0 0.0
    %1556 = vmatpush1.msra.mxu0 0.0
    %1557 = vmatprep.subr.mxu0 0.0
    %1558 = vmatpush1.msra.mxu0 0.0
    %1559 = vmatprep.subr.mxu0 0.0
    %1560 = vmatpush1.msra.mxu0 0.0
    %1561 = vmatprep.subr.mxu0 0.0
    %1562 = vmatpush1.msra.mxu0 0.0
    %1563 = vmatprep.subr.mxu0 0.0
    %1564 = vmatpush1.msra.mxu0 0.0
    %1565 = vmatprep.subr.mxu0 0.0
    %1566 = vmatpush1.msra.mxu0 0.0
    %1567 = vmatprep.subr.mxu0 0.0
    %1568 = vmatpush1.msra.mxu0 0.0
    %1569 = vmatprep.subr.mxu0 %v245
    %1570 = vmatpush1.msra.mxu0 %v244
    %1571 = vmatprep.subr.mxu0 %v243
    %1572 = vmatpush1.msra.mxu0 %v242
    %1573 = vmatprep.subr.mxu0 %v241
    %1574 = vmatpush1.msra.mxu0 %v240
    %1575 = vmatprep.subr.mxu0 %v239
    %1576 = vmatpush1.msra.mxu0 %v238
    %1577 = vmatprep.subr.mxu0 %v237
    %1578 = vmatpush1.msra.mxu0 %v236
    %1579 = vmatprep.subr.mxu0 %v235
    %1580 = vmatpush1.msra.mxu0 %v234
    %1581 = vmatprep.subr.mxu0 %v233
    %1582 = vmatpush1.msra.mxu0 %v232
    %1583 = vmatprep.subr.mxu0 %v231
    %1584 = vmatpush1.msra.mxu0 %v230
    %1585 = vmatprep.subr.mxu0 0.0
    %1586 = vmatpush2.msra.mxu0 0.0
    %1587 = vmatprep.subr.mxu0 0.0
    %1588 = vmatpush2.msra.mxu0 0.0
    %1589 = vmatprep.subr.mxu0 0.0
    %1590 = vmatpush2.msra.mxu0 0.0
    %1591 = vmatprep.subr.mxu0 0.0
    %1592 = vmatpush2.msra.mxu0 0.0
    %1593 = vmatprep.subr.mxu0 0.0
    %1594 = vmatpush2.msra.mxu0 0.0
    %1595 = vmatprep.subr.mxu0 0.0
    %1596 = vmatpush2.msra.mxu0 0.0
    %1597 = vmatprep.subr.mxu0 0.0
    %1598 = vmatpush2.msra.mxu0 0.0
    %1599 = vmatprep.subr.mxu0 0.0
    %1600 = vmatpush2.msra.mxu0 0.0
    %1601 = vmatprep.subr.mxu0 0.0
    %1602 = vmatpush2.msra.mxu0 0.0
    %1603 = vmatprep.subr.mxu0 0.0
    %1604 = vmatpush2.msra.mxu0 0.0
    %1605 = vmatprep.subr.mxu0 0.0
    %1606 = vmatpush2.msra.mxu0 0.0
    %1607 = vmatprep.subr.mxu0 0.0
    %1608 = vmatpush2.msra.mxu0 0.0
    %1609 = vmatprep.subr.mxu0 0.0
    %1610 = vmatpush2.msra.mxu0 0.0
    %1611 = vmatprep.subr.mxu0 0.0
    %1612 = vmatpush2.msra.mxu0 0.0
    %1613 = vmatprep.subr.mxu0 0.0
    %1614 = vmatpush2.msra.mxu0 0.0
    %1615 = vmatprep.subr.mxu0 0.0
    %1616 = vmatpush2.msra.mxu0 0.0
    %1617 = vmatprep.mubr.f32.mxu0 0.0
    %1618 = vmatmul.mubr.f32.gmra.mxu0 %v1551
    %v1619 = vpop.f32.mrf.mxu0
    %v1620 = vadd.f32 0.0, %v1619
    %v1621 = vpop.f32.mrf.mxu0
    %v1622 = vadd.f32 0.0, %v1621
    %1623 = vdwg.mxu0
    %v1626 = vcombine.low %v1620, %v1622
    %v1628 = vunpack.c.l.s4 1966171168
    %v1629 = vunpack.c.0.s8 %v1628
    %v1630 = vlaneseq
    %v1631 = vshrl.u32 %v1630, 7
    %v1632 = vsub.s32 %v1629, %v1631
    %v1633 = vrot.slane %v1626, %v1632
    %v1634 = vcombine.high %v1633, %v1633
    %v1636 = vunpack.c.l.s4 1966171168
    %v1637 = vunpack.c.0.s8 %v1636
    %v1638 = vlaneseq
    %v1639 = vshrl.u32 %v1638, 7
    %v1640 = vsub.s32 %v1637, %v1639
    %v1641 = vrot.slane %v1633, %v1640
    %v1643 = vunpack.c.l.s4 1966171168
    %v1644 = vunpack.c.0.s8 %v1643
    %v1645 = vlaneseq
    %v1646 = vshrl.u32 %v1645, 7
    %v1647 = vsub.s32 %v1644, %v1646
    %v1648 = vrot.slane %v1634, %v1647
    %v1651 = vadd.f32 %v1532, %v1641
    %v1652 = vadd.f32 %v1533, %v1648
    %v1653 = vxor.u32 %v1651, 2147483648
    %v1654 = vxor.u32 %v1652, 2147483648
    %v1655 = vmul.f32 %v1653, 1.442695
    %v1656 = vpow.pop %v1655
    %v1657 = vmul.f32 %v1654, 1.442695
    %v1658 = vpow.pop %v1657
    %v1659 = vadd.f32 %v1656, 1.0
    %v1660 = vadd.f32 %v1658, 1.0
    %v1661 = vrcp.pop %v1659
    %v1662 = vmul.f32 1.0, %v1661
    %v1663 = vrcp.pop %v1660
    %v1664 = vmul.f32 1.0, %v1663
    %v1665 = vtanh.pop %v1651
    %v1666 = vtanh.pop %v1652
    %v1667 = vmul.f32 %v1662, %v1501
    %v1668 = vmul.f32 %v1664, %v1502
    %v1671 = vrot.slane %v1665, 1
    %v1672 = vrot.slane %v1666, 1
    %v1675 = vmul.f32 %v1662, %v1671
    %v1676 = vmul.f32 %v1664, %v1672
    %1679 = vrot.lane.b32.xlu0 %v1675, 64
    %v1680 = vpop.permute.xlu0 %1679
    %1681 = vrot.lane.b32.xlu0 %v1676, 64
    %v1682 = vpop.permute.xlu0 %1681
    %v1685 = vadd.f32 %v1667, %v1680
    %v1686 = vadd.f32 %v1668, %v1682
    %v1687 = vtanh.pop %v1685
    %v1688 = vtanh.pop %v1686
    %1691 = vrot.lane.b32.xlu0 %v1662, 64
    %v1692 = vpop.permute.xlu0 %1691
    %1693 = vrot.lane.b32.xlu0 %v1664, 64
    %v1694 = vpop.permute.xlu0 %1693
    %v1695 = vrot.slane %v1692, 1
    %v1696 = vrot.slane %v1694, 1
    %1701 = vrot.lane.b32.xlu0 %v1687, 64
    %v1702 = vpop.permute.xlu0 %1701
    %1703 = vrot.lane.b32.xlu0 %v1688, 64
    %v1704 = vpop.permute.xlu0 %1703
    %v1707 = vmul.f32 %v1695, %v1702
    %v1708 = vmul.f32 %v1696, %v1704
    %v1711 = vcombine.low %v1707, %v1708
    %v1713 = vunpack.c.l.s4 1966171168
    %v1714 = vunpack.c.0.s8 %v1713
    %v1715 = vlaneseq
    %v1716 = vshrl.u32 %v1715, 7
    %v1717 = vsub.s32 %v1714, %v1716
    %v1718 = vrot.slane %v1711, %v1717
    %v1720 = vunpack.c.l.s4 1966171168
    %v1721 = vunpack.c.0.s8 %v1720
    %v1722 = vlaneseq
    %v1723 = vshrl.u32 %v1722, 7
    %v1724 = vsub.s32 %v1721, %v1723
    %v1725 = vrot.slane %v1718, %v1724
    %vm1728 = vcmask 261120
    %v1729 = vsel %vm1728, %v1725, %v441
    %vm1730 = vcmask 517120
    %1731 = vst.msk [vmem:[#allocation7] sm:$0x3] %vm1730, %v1729
    %v1732 = vld [vmem:[%s5] sm:$0xff]
    %v1733 = vld [vmem:[%s5 + $0x8] sm:$0xff]
    %v1734 = vld [vmem:[%s5 + $0x10] sm:$0xff]
    %v1735 = vld [vmem:[%s5 + $0x18] sm:$0xff]
    %v1736 = vld [vmem:[%s5 + $0x20] sm:$0xff]
    %v1737 = vld [vmem:[%s5 + $0x28] sm:$0xff]
    %v1738 = vld [vmem:[%s5 + $0x30] sm:$0xff]
    %v1739 = vld [vmem:[%s5 + $0x38] sm:$0xff]
    %v1740 = vld [vmem:[%s6] sm:$0x1]
    %v1742 = vlaneseq
    %v1743 = vshrl.u32 %v1742, 7
    %v1744 = vsub.s32 0, %v1743
    %v1745 = vrot.slane %v1740, %v1744
    %v1748 = vsel %vm255, %v1729, 0
    %1750 = vmatprep.subr.mxu0 0.0
    %1751 = vmatpush1.msra.mxu0 0.0
    %1752 = vmatprep.subr.mxu0 0.0
    %1753 = vmatpush1.msra.mxu0 0.0
    %1754 = vmatprep.subr.mxu0 0.0
    %1755 = vmatpush1.msra.mxu0 0.0
    %1756 = vmatprep.subr.mxu0 0.0
    %1757 = vmatpush1.msra.mxu0 0.0
    %1758 = vmatprep.subr.mxu0 0.0
    %1759 = vmatpush1.msra.mxu0 0.0
    %1760 = vmatprep.subr.mxu0 0.0
    %1761 = vmatpush1.msra.mxu0 0.0
    %1762 = vmatprep.subr.mxu0 0.0
    %1763 = vmatpush1.msra.mxu0 0.0
    %1764 = vmatprep.subr.mxu0 0.0
    %1765 = vmatpush1.msra.mxu0 0.0
    %1766 = vmatprep.subr.mxu0 0.0
    %1767 = vmatpush1.msra.mxu0 %v1739
    %1768 = vmatprep.subr.mxu0 0.0
    %1769 = vmatpush1.msra.mxu0 %v1738
    %1770 = vmatprep.subr.mxu0 0.0
    %1771 = vmatpush1.msra.mxu0 %v1737
    %1772 = vmatprep.subr.mxu0 0.0
    %1773 = vmatpush1.msra.mxu0 %v1736
    %1774 = vmatprep.subr.mxu0 0.0
    %1775 = vmatpush1.msra.mxu0 %v1735
    %1776 = vmatprep.subr.mxu0 0.0
    %1777 = vmatpush1.msra.mxu0 %v1734
    %1778 = vmatprep.subr.mxu0 0.0
    %1779 = vmatpush1.msra.mxu0 %v1733
    %1780 = vmatprep.subr.mxu0 0.0
    %1781 = vmatpush1.msra.mxu0 %v1732
    %1782 = vmatprep.subr.mxu0 0.0
    %1783 = vmatpush2.msra.mxu0 0.0
    %1784 = vmatprep.subr.mxu0 0.0
    %1785 = vmatpush2.msra.mxu0 0.0
    %1786 = vmatprep.subr.mxu0 0.0
    %1787 = vmatpush2.msra.mxu0 0.0
    %1788 = vmatprep.subr.mxu0 0.0
    %1789 = vmatpush2.msra.mxu0 0.0
    %1790 = vmatprep.subr.mxu0 0.0
    %1791 = vmatpush2.msra.mxu0 0.0
    %1792 = vmatprep.subr.mxu0 0.0
    %1793 = vmatpush2.msra.mxu0 0.0
    %1794 = vmatprep.subr.mxu0 0.0
    %1795 = vmatpush2.msra.mxu0 0.0
    %1796 = vmatprep.subr.mxu0 0.0
    %1797 = vmatpush2.msra.mxu0 0.0
    %1798 = vmatprep.subr.mxu0 0.0
    %1799 = vmatpush2.msra.mxu0 0.0
    %1800 = vmatprep.subr.mxu0 0.0
    %1801 = vmatpush2.msra.mxu0 0.0
    %1802 = vmatprep.subr.mxu0 0.0
    %1803 = vmatpush2.msra.mxu0 0.0
    %1804 = vmatprep.subr.mxu0 0.0
    %1805 = vmatpush2.msra.mxu0 0.0
    %1806 = vmatprep.subr.mxu0 0.0
    %1807 = vmatpush2.msra.mxu0 0.0
    %1808 = vmatprep.subr.mxu0 0.0
    %1809 = vmatpush2.msra.mxu0 0.0
    %1810 = vmatprep.subr.mxu0 0.0
    %1811 = vmatpush2.msra.mxu0 0.0
    %1812 = vmatprep.subr.mxu0 0.0
    %1813 = vmatpush2.msra.mxu0 0.0
    %1814 = vmatprep.mubr.f32.mxu0 0.0
    %1815 = vmatmul.mubr.f32.gmra.mxu0 %v1748
    %v1816 = vpop.f32.mrf.mxu0
    %v1817 = vadd.f32 %v1745, %v1816
    %v1818 = vpop.f32.mrf.mxu0
    %1819 = vdwg.mxu0
    %vm1820 = vcmask 9216
    %v1821 = vsel %vm1820, %v1817, -inf
    %1822 = vmax.xlane.f32.xlu0 %v1821
    %v1823 = vpop.xlane.xlu0 %1822
    %v1824 = vsub.f32 %v1817, %v1823
    %v1825 = vmul.f32 %v1824, 1.442695
    %v1826 = vpow.pop %v1825
    %v1827 = vsel %vm1820, %v1826, 0.0
    %1828 = vadd.xlane.f32.xlu0 %v1827
    %v1829 = vpop.xlane.xlu0 %1828
    %v1830 = vrcp.pop %v1829
    %v1831 = vmul.f32 %v1826, %v1830
    %1832 = vst.msk [vmem:[%s7] sm:$0x3] %vm1820, %v1831
    // Predicated region
    $region34: #{lstm_model_forward.1} parent=1 // pred_check
      _
    $region35: #{lstm_model_forward.1} parent=1 // pred_check_branch
      %1834 = sbr.rel (0) target = $region37
    $region36: #{lstm_model_forward.1} parent=1 // pred_region
      _
    $region37: #{lstm_model_forward.1} parent=1 // pred_fallthru
      _
    // Predicated region
    $region38: #{lstm_model_forward.1} parent=1 // pred_check
      _
    $region39: #{lstm_model_forward.1} parent=1 // pred_check_branch
      %1836 = sbr.rel (0) target = $region41
    $region40: #{lstm_model_forward.1} parent=1 // pred_region
      %s1838 = ssub.s32 32, 32
      %1839 = vsyncadd [#allocation6], %s1838
      %s1841 = sshll.u32 [#allocation7], 4
      %s1842 = int_to_ptr.vmem [resolvable:$true] %s1841
      %1844 = dma.vmem_to_hbm [thread:$0]  %s1842, 32, %s8, [#allocation6]
    $region41: #{lstm_model_forward.1} parent=1 // pred_fallthru
      _
    // Predicated region
    $region42: #{lstm_model_forward.1} parent=1 // pred_check
      _
    $region43: #{lstm_model_forward.1} parent=1 // pred_check_branch
      %1846 = sbr.rel (0) target = $region45
    $region44: #{lstm_model_forward.1} parent=1 // pred_region
      _
    $region45: #{lstm_model_forward.1} parent=1 // pred_fallthru
      _
    // Predicated region
    $region46: #{lstm_model_forward.1} parent=1 // pred_check
      _
    $region47: #{lstm_model_forward.1} parent=1 // pred_check_branch
      %1848 = sbr.rel (0) target = $region49
    $region48: #{lstm_model_forward.1} parent=1 // pred_region
      %1849 = dma.done [#allocation6], 32
    $region49: #{lstm_model_forward.1} parent=1 // pred_fallthru
      _
    %1850 = vsyncpa [#allocation5], 1
    %1851 = vsyncpa [#allocation6], 1

</llo_original>
